<compile_context>
chip_gen: v5e
topology: v5e:2x2
jax: 0.10.0
libtpu: 0.0.40
codegen_flags: <defaults>
</compile_context>

<pallas_src>
import jax
import jax.numpy as jnp
import numpy as np
from jax.experimental import pallas as pl
from jax.experimental.pallas import tpu as pltpu


# ---------------------------------------------------------------------------
# Pallas kernel
# ---------------------------------------------------------------------------
def rvnn_bu_kernel(h_ref, adj_ref, w_emb_ref,
                   w_x3_ref, b_x3_ref,
                   w_iouh_rz_ref, w_couh_ref,
                   h_bu_ref):
    Bt, N, f_in = h_ref.shape
    F = w_emb_ref.shape[1]

    # ---------------- hoisted, loop-invariant work ----------------
    h2d = h_ref[...].reshape(Bt * N, f_in)

    # Two INDEPENDENT prologue matmuls (w_emb pre-fused into w_x3 in the wrapper),
    # each a single flat MXU matmul:
    #   h_e    -> only feeds the hoisted triangular child aggregation
    #   proj_x -> all x-side GRU projections, columns [ r (F) | z (F) | cand (F) ],
    #             x- and child-side biases already folded in.
    h_e = jnp.dot(h2d, w_emb_ref[...],
                  preferred_element_type=jnp.float32).reshape(Bt, N, F)
    proj_x = (jnp.dot(h2d, w_x3_ref[...], preferred_element_type=jnp.float32)
              + b_x3_ref[...]).reshape(Bt, N, 3 * F)
    ixz = proj_x[:, :, :2 * F]          # x-side r|z pre-activation   (Bt, N, 2F)
    cx = proj_x[:, :, 2 * F:]           # x-side candidate pre-act    (Bt, N, F)

    # Row-normalised adjacency (constant across the whole recursion).
    # No inf is generated for zero-degree rows.
    adj = adj_ref[...]
    d = jnp.sum(adj, axis=-1)                                        # (Bt, N)
    d_inv = jnp.where(d != 0, 1.0 / jnp.where(d != 0, d, 1.0), 0.0)
    adj_n = adj * d_inv[:, :, None]                                  # (Bt, N, N)

    # Hoisted lower-triangular contribution from the ORIGINAL h_e rows.
    # During the bottom-up sweep, node idx reads original rows m <= idx (incl.
    # the diagonal: node idx itself is not yet updated when it is processed)
    # and updated rows m > idx, hence  x_child(idx) = base[idx] + acc[idx].
    row = jax.lax.broadcasted_iota(jnp.int32, (N, N), 0)
    col = jax.lax.broadcasted_iota(jnp.int32, (N, N), 1)
    adj_lo = jnp.where((col <= row)[None, :, :], adj_n, 0.0)         # (Bt, N, N)
    base = jnp.einsum('bnm,bmf->bnf', adj_lo, h_e,
                      preferred_element_type=jnp.float32)            # (Bt, N, F)

    w_iouh_rz = w_iouh_rz_ref[...]      # (F, 2F), columns [ r | z ]
    w_couh = w_couh_ref[...]            # (F, F)

    # ---------------- bottom-up recursion (the truly serial core) ----------------
    # acc[n] accumulates sum_{already-updated m > idx} adj_n[n, m] * h_new[m] via a
    # rank-1 VPU update per step; nothing else is concatenated / reloaded on the
    # loop-carried path.  Per step: 2 small matmuls (rz fused, candidate), EUP
    # sigmoid/tanh, and a few VPU ops.
    acc = jnp.zeros((Bt, N, F), jnp.float32)
    for i in range(N):
        idx = N - 1 - i
        x_child = base[:, idx, :] + acc[:, idx, :]                   # (Bt, F)

        # fused r|z gate matmul (r in lanes [0, F), z slice off the critical path)
        gates = jax.nn.sigmoid(
            ixz[:, idx, :]
            + jnp.dot(x_child, w_iouh_rz, preferred_element_type=jnp.float32))
        r = gates[:, :F]
        z = gates[:, F:]
        hc = jnp.tanh(
            cx[:, idx, :]
            + jnp.dot(r * x_child, w_couh, preferred_element_type=jnp.float32))
        h_new = z * x_child + (1.0 - z) * hc                         # (Bt, F)

        # write-only output row store; does not gate the next serial step
        h_bu_ref[:, idx, :] = h_new

        # rank-1 accumulator update feeding all not-yet-processed rows (< idx)
        if idx > 0:
            acc = acc + adj_n[:, :, idx][:, :, None] * h_new[:, None, :]


# ---------------------------------------------------------------------------
# wrapper
# ---------------------------------------------------------------------------
def rvnn_bu_forward(h, adj, params, *, batch_tile=None):
    B, N, f_in = h.shape
    F = params['w_emb'].shape[1]
    HI = jax.lax.Precision.HIGHEST

    # ----- one-time weight reorganisation (pure constant folding, outside kernel) -----
    # fat x-projection with w_emb pre-fused; columns [ r (F) | z (F) | candidate (F) ];
    # both x-side and child-side biases folded in (loop-invariant constants).
    w_x3 = jnp.concatenate([params['w_ioux'], params['w_coux']], axis=1)      # (F, 3F)
    w_x3_fused = jnp.dot(params['w_emb'], w_x3, precision=HI)                 # (f_in, 3F)
    b_x3 = jnp.concatenate([params['b_ioux'] + params['b_iouh'],
                            params['b_coux'] + params['b_couh']], axis=1)     # (1, 3F)
    # classifier head does not depend on the recursion -> fold w_emb into fc too
    w_fc_fused = jnp.dot(params['w_emb'], params['w_fc'], precision=HI)       # (f_in, 2)

    # Batch tiling: default = whole batch in one grid step (grid=(1,)).  On v7x,
    # call with batch_tile=B//2 to shard the independent per-tree recursions across
    # the two TensorCores; the 3-D (bt, N, F) output block keeps the BlockSpec
    # (8,128)/full-dim rule satisfied for any bt.  Not worth it on v5e/v6e (1 TC:
    # grid just serialises) or at B=2 (per-core work ~ per-step overhead).
    bt = B if batch_tile is None else batch_tile
    assert B % bt == 0
    grid = (B // bt,)

    in_specs = [
        pl.BlockSpec((bt, N, f_in), lambda i: (i, 0, 0)),            # h
        pl.BlockSpec((bt, N, N), lambda i: (i, 0, 0)),               # adj
        pl.BlockSpec(params['w_emb'].shape, lambda i: (0, 0)),       # w_emb
        pl.BlockSpec(w_x3_fused.shape, lambda i: (0, 0)),            # w_x3_fused
        pl.BlockSpec(b_x3.shape, lambda i: (0, 0)),                  # b_x3
        pl.BlockSpec(params['w_iouh'].shape, lambda i: (0, 0)),      # w_iouh (r|z fused)
        pl.BlockSpec(params['w_couh'].shape, lambda i: (0, 0)),      # w_couh
    ]
    out_specs = pl.BlockSpec((bt, N, F), lambda i: (i, 0, 0))

    h_bu = pl.pallas_call(
        rvnn_bu_kernel,
        grid=grid,
        in_specs=in_specs,
        out_specs=out_specs,
        out_shape=jax.ShapeDtypeStruct((B, N, F), jnp.float32),
        compiler_params=pltpu.CompilerParams(
            dimension_semantics=("parallel",)),
    )(h, adj, params['w_emb'], w_x3_fused, b_x3,
      params['w_iouh'], params['w_couh'])

    # classifier head (the module's only return value): y = fc(emb(h)[:, 0, :]),
    # computed as a plain XLA op since it is independent of the recursion.
    y = jnp.dot(h[:, 0, :], w_fc_fused, precision=HI) + params['b_fc']

    # the module only returns y; h_bu (= final h_e_copy) is returned for validation
    return y, h_bu


# ---------------------------------------------------------------------------
# pure-JAX reference (mirrors the PyTorch forward exactly; full-precision matmuls)
# ---------------------------------------------------------------------------
def _tree_child_agg(adj, hm, precision):
    d = jnp.sum(adj, axis=-1)
    d_inv = jnp.where(d != 0, 1.0 / jnp.where(d != 0, d, 1.0), 0.0)
    adj_n = adj * d_inv[:, :, None]
    return jnp.einsum('bnm,bmf->bnf', adj_n, hm, precision=precision)


def rvnn_bu_reference(h, adj, params):
    HI = jax.lax.Precision.HIGHEST
    F = params['w_emb'].shape[1]
    N = h.shape[1]
    h_e = jnp.einsum('bnf,fo->bno', h, params['w_emb'], precision=HI)
    h_child = _tree_child_agg(adj, h_e, HI)
    h_copy = h_e
    for i in range(N):
        idx = N - 1 - i
        x = h_e[:, idx, :]
        xc = h_child[:, idx, :]
        iou = (jnp.dot(x, params['w_ioux'], precision=HI) + params['b_ioux']
               + jnp.dot(xc, params['w_iouh'], precision=HI) + params['b_iouh'])
        r = jax.nn.sigmoid(iou[:, :F])
        z = jax.nn.sigmoid(iou[:, F:])
        hc = jnp.tanh(jnp.dot(x, params['w_coux'], precision=HI) + params['b_coux']
                      + jnp.dot(r * xc, params['w_couh'], precision=HI)
                      + params['b_couh'])
        h_new = z * xc + (1.0 - z) * hc
        h_copy = h_copy.at[:, idx, :].set(h_new)
        h_child = _tree_child_agg(adj, h_copy, HI)
    y = jnp.dot(h_e[:, 0, :], params['w_fc'], precision=HI) + params['b_fc']
    return y, h_copy


# ---------------------------------------------------------------------------
# deterministic synthetic parameters
# ---------------------------------------------------------------------------
def init_params(key, f_in, f_out):
    ks = jax.random.split(key, 11)
    scale = 0.1

    def W(k, shape):
        return jax.random.normal(k, shape, jnp.float32) * scale

    return dict(
        w_emb=W(ks[0], (f_in, f_out)),
        w_ioux=W(ks[1], (f_out, 2 * f_out)), b_ioux=W(ks[2], (1, 2 * f_out)),
        w_iouh=W(ks[3], (f_out, 2 * f_out)), b_iouh=W(ks[4], (1, 2 * f_out)),
        w_coux=W(ks[5], (f_out, f_out)),     b_coux=W(ks[6], (1, f_out)),
        w_couh=W(ks[7], (f_out, f_out)),     b_couh=W(ks[8], (1, f_out)),
        w_fc=W(ks[9], (f_out, 2)),           b_fc=W(ks[10], (1, 2)),
    )


if __name__ == "__main__":
    key = jax.random.PRNGKey(0)
    B, N, f_in, f_out = 2, 8, 16, 32          # batch=2, num_posts=8, hidden=32

    k_h, k_adj, k_p = jax.random.split(key, 3)
    h = jax.random.normal(k_h, (B, N, f_in), jnp.float32)
    adj = (jax.random.uniform(k_adj, (B, N, N)) > 0.5).astype(jnp.float32)
    params = init_params(k_p, f_in, f_out)

    y, h_bu = rvnn_bu_forward(h, adj, params)
    y = jax.block_until_ready(y)
    h_bu = jax.block_until_ready(h_bu)

    y_ref, h_bu_ref = rvnn_bu_reference(h, adj, params)
    # Tolerance tightened 4x vs the previous 2e-2.  It is kept above ~1e-5 because
    # the in-kernel MXU f32 pass precision is not pinned to the XLA reference's and
    # the w_emb pre-fusion re-associates the matmuls; structural/slicing bugs (e.g.
    # a wrong triangular mask) produce errors >= 2e-2 and are still caught with a
    # wide margin.
    np.testing.assert_allclose(np.asarray(y), np.asarray(y_ref), rtol=5e-3, atol=5e-3)
    np.testing.assert_allclose(np.asarray(h_bu), np.asarray(h_bu_ref), rtol=5e-3, atol=5e-3)

    print("KERNEL_OK")
</pallas_src>

<mosaic_0001>
module attributes {stable_mosaic.version = 11 : i64} {
  func.func @rvnn_bu_kernel(%arg0: i32, %arg1: memref<2x8x16xf32, #tpu.memory_space<vmem>>, %arg2: memref<2x8x8xf32, #tpu.memory_space<vmem>>, %arg3: memref<16x32xf32, #tpu.memory_space<vmem>>, %arg4: memref<16x96xf32, #tpu.memory_space<vmem>>, %arg5: memref<1x96xf32, #tpu.memory_space<vmem>>, %arg6: memref<32x64xf32, #tpu.memory_space<vmem>>, %arg7: memref<32x32xf32, #tpu.memory_space<vmem>>, %arg8: memref<2x8x32xf32, #tpu.memory_space<vmem>>) attributes {dimension_semantics = [#tpu.dimension_semantics<parallel>], iteration_bounds = array<i64: 1>, scalar_prefetch = 0 : i64, scratch_operands = 0 : i64, tpu.core_type = #tpu.core_type<tc>, window_params = [{transform_indices = @transform_0, window_bounds = array<i64: 2, 8, 16>}, {transform_indices = @transform_1, window_bounds = array<i64: 2, 8, 8>}, {pipeline_mode = #tpu.pipeline_mode<synchronous>, transform_indices = @transform_2, window_bounds = array<i64: 16, 32>}, {pipeline_mode = #tpu.pipeline_mode<synchronous>, transform_indices = @transform_3, window_bounds = array<i64: 16, 96>}, {pipeline_mode = #tpu.pipeline_mode<synchronous>, transform_indices = @transform_4, window_bounds = array<i64: 1, 96>}, {pipeline_mode = #tpu.pipeline_mode<synchronous>, transform_indices = @transform_5, window_bounds = array<i64: 32, 64>}, {pipeline_mode = #tpu.pipeline_mode<synchronous>, transform_indices = @transform_6, window_bounds = array<i64: 32, 32>}, {transform_indices = @transform_7, window_bounds = array<i64: 2, 8, 32>}]} {
    %c0 = arith.constant 0 : index
    %c0_0 = arith.constant 0 : index
    %c0_1 = arith.constant 0 : index
    %0 = vector.load %arg1[%c0, %c0_0, %c0_1] : memref<2x8x16xf32, #tpu.memory_space<vmem>>, vector<2x8x16xf32>
    %1 = vector.shape_cast %0 : vector<2x8x16xf32> to vector<16x16xf32>
    %c0_2 = arith.constant 0 : index
    %c0_3 = arith.constant 0 : index
    %2 = vector.load %arg3[%c0_2, %c0_3] : memref<16x32xf32, #tpu.memory_space<vmem>>, vector<16x32xf32>
    %cst = arith.constant dense<0.000000e+00> : vector<16x32xf32>
    %3 = tpu.matmul %1, %2, %cst {dimension_numbers = #tpu.dot_dimension_numbers<[1], [0], [0], [1], [0, 0, 1, 1], [], []>} : vector<16x16xf32>, vector<16x32xf32>, vector<16x32xf32> -> vector<16x32xf32>
    %4 = vector.shape_cast %3 : vector<16x32xf32> to vector<2x8x32xf32>
    %c0_4 = arith.constant 0 : index
    %c0_5 = arith.constant 0 : index
    %5 = vector.load %arg4[%c0_4, %c0_5] : memref<16x96xf32, #tpu.memory_space<vmem>>, vector<16x96xf32>
    %cst_6 = arith.constant dense<0.000000e+00> : vector<16x96xf32>
    %6 = tpu.matmul %1, %5, %cst_6 {dimension_numbers = #tpu.dot_dimension_numbers<[1], [0], [0], [1], [0, 0, 1, 1], [], []>} : vector<16x16xf32>, vector<16x96xf32>, vector<16x96xf32> -> vector<16x96xf32>
    %c0_7 = arith.constant 0 : index
    %c0_8 = arith.constant 0 : index
    %7 = vector.load %arg5[%c0_7, %c0_8] : memref<1x96xf32, #tpu.memory_space<vmem>>, vector<1x96xf32>
    %8 = vector.broadcast %7 : vector<1x96xf32> to vector<16x96xf32>
    %9 = arith.addf %6, %8 : vector<16x96xf32>
    %10 = vector.shape_cast %9 : vector<16x96xf32> to vector<2x8x96xf32>
    %11 = vector.extract_strided_slice %10 {offsets = [0, 0, 0], sizes = [2, 8, 64], strides = [1, 1, 1]} : vector<2x8x96xf32> to vector<2x8x64xf32>
    %12 = vector.extract_strided_slice %10 {offsets = [0, 0, 64], sizes = [2, 8, 32], strides = [1, 1, 1]} : vector<2x8x96xf32> to vector<2x8x32xf32>
    %c0_9 = arith.constant 0 : index
    %c0_10 = arith.constant 0 : index
    %c0_11 = arith.constant 0 : index
    %13 = vector.load %arg2[%c0_9, %c0_10, %c0_11] : memref<2x8x8xf32, #tpu.memory_space<vmem>>, vector<2x8x8xf32>
    %cst_12 = arith.constant dense<0.000000e+00> : vector<2x8xf32>
    %14 = vector.multi_reduction <add>, %13, %cst_12 [2] : vector<2x8x8xf32> to vector<2x8xf32>
    %cst_13 = arith.constant 0.000000e+00 : f32
    %15 = vector.broadcast %cst_13 : f32 to vector<2x8xf32>
    %16 = arith.cmpf one, %14, %15 : vector<2x8xf32>
    %cst_14 = arith.constant 0.000000e+00 : f32
    %17 = vector.broadcast %cst_14 : f32 to vector<2x8xf32>
    %18 = arith.cmpf one, %14, %17 : vector<2x8xf32>
    %cst_15 = arith.constant 1.000000e+00 : f32
    %19 = vector.broadcast %cst_15 : f32 to vector<2x8xf32>
    %20 = arith.select %18, %14, %19 : vector<2x8xi1>, vector<2x8xf32>
    %cst_16 = arith.constant 1.000000e+00 : f32
    %21 = vector.broadcast %cst_16 : f32 to vector<2x8xf32>
    %22 = arith.divf %21, %20 : vector<2x8xf32>
    %cst_17 = arith.constant 0.000000e+00 : f32
    %23 = vector.broadcast %cst_17 : f32 to vector<2x8xf32>
    %24 = arith.select %16, %22, %23 : vector<2x8xi1>, vector<2x8xf32>
    %25 = vector.shape_cast %24 : vector<2x8xf32> to vector<2x8x1xf32>
    %26 = vector.broadcast %25 : vector<2x8x1xf32> to vector<2x8x8xf32>
    %27 = arith.mulf %13, %26 : vector<2x8x8xf32>
    %28 = tpu.iota {dimensions = array<i32: 0>} : vector<8x8xi32>
    %29 = tpu.iota {dimensions = array<i32: 1>} : vector<8x8xi32>
    %30 = arith.cmpi sle, %29, %28 : vector<8x8xi32>
    %31 = vector.shape_cast %30 : vector<8x8xi1> to vector<1x8x8xi1>
    %cst_18 = arith.constant 0.000000e+00 : f32
    %32 = vector.shape_cast %31 : vector<1x8x8xi1> to vector<1x8x8xi1>
    %33 = vector.broadcast %32 : vector<1x8x8xi1> to vector<2x8x8xi1>
    %34 = vector.broadcast %cst_18 : f32 to vector<2x8x8xf32>
    %35 = arith.select %33, %27, %34 : vector<2x8x8xi1>, vector<2x8x8xf32>
    "tpu.trace_start"() <{level = 10 : i32, message = "bnm,bmf->bnf"}> : () -> ()
    %cst_19 = arith.constant dense<0.000000e+00> : vector<2x8x32xf32>
    %36 = tpu.matmul %35, %4, %cst_19 {dimension_numbers = #tpu.dot_dimension_numbers<[2], [1], [1], [2], [0, 0, 0, 1, 1, 2], [0], [0]>} : vector<2x8x8xf32>, vector<2x8x32xf32>, vector<2x8x32xf32> -> vector<2x8x32xf32>
    "tpu.trace_stop"() : () -> ()
    %c0_20 = arith.constant 0 : index
    %c0_21 = arith.constant 0 : index
    %37 = vector.load %arg6[%c0_20, %c0_21] : memref<32x64xf32, #tpu.memory_space<vmem>>, vector<32x64xf32>
    %c0_22 = arith.constant 0 : index
    %c0_23 = arith.constant 0 : index
    %38 = vector.load %arg7[%c0_22, %c0_23] : memref<32x32xf32, #tpu.memory_space<vmem>>, vector<32x32xf32>
    %cst_24 = arith.constant 0.000000e+00 : f32
    %39 = vector.broadcast %cst_24 : f32 to vector<2x8x32xf32>
    %40 = vector.extract_strided_slice %36 {offsets = [0, 7, 0], sizes = [2, 1, 32], strides = [1, 1, 1]} : vector<2x8x32xf32> to vector<2x1x32xf32>
    %41 = vector.shape_cast %40 : vector<2x1x32xf32> to vector<2x32xf32>
    %42 = vector.extract_strided_slice %39 {offsets = [0, 7, 0], sizes = [2, 1, 32], strides = [1, 1, 1]} : vector<2x8x32xf32> to vector<2x1x32xf32>
    %43 = vector.shape_cast %42 : vector<2x1x32xf32> to vector<2x32xf32>
    %44 = arith.addf %41, %43 : vector<2x32xf32>
    %45 = vector.extract_strided_slice %11 {offsets = [0, 7, 0], sizes = [2, 1, 64], strides = [1, 1, 1]} : vector<2x8x64xf32> to vector<2x1x64xf32>
    %46 = vector.shape_cast %45 : vector<2x1x64xf32> to vector<2x64xf32>
    %cst_25 = arith.constant dense<0.000000e+00> : vector<2x64xf32>
    %47 = tpu.matmul %44, %37, %cst_25 {dimension_numbers = #tpu.dot_dimension_numbers<[1], [0], [0], [1], [0, 0, 1, 1], [], []>} : vector<2x32xf32>, vector<32x64xf32>, vector<2x64xf32> -> vector<2x64xf32>
    %48 = arith.addf %46, %47 : vector<2x64xf32>
    %49 = arith.negf %48 : vector<2x64xf32>
    %50 = math.exp %49 : vector<2x64xf32>
    %cst_26 = arith.constant 1.000000e+00 : f32
    %51 = vector.broadcast %cst_26 : f32 to vector<2x64xf32>
    %52 = arith.addf %51, %50 : vector<2x64xf32>
    %53 = arith.divf %51, %52 : vector<2x64xf32>
    %54 = vector.extract_strided_slice %53 {offsets = [0, 0], sizes = [2, 32], strides = [1, 1]} : vector<2x64xf32> to vector<2x32xf32>
    %55 = vector.extract_strided_slice %53 {offsets = [0, 32], sizes = [2, 32], strides = [1, 1]} : vector<2x64xf32> to vector<2x32xf32>
    %56 = vector.extract_strided_slice %12 {offsets = [0, 7, 0], sizes = [2, 1, 32], strides = [1, 1, 1]} : vector<2x8x32xf32> to vector<2x1x32xf32>
    %57 = vector.shape_cast %56 : vector<2x1x32xf32> to vector<2x32xf32>
    %58 = arith.mulf %54, %44 : vector<2x32xf32>
    %cst_27 = arith.constant dense<0.000000e+00> : vector<2x32xf32>
    %59 = tpu.matmul %58, %38, %cst_27 {dimension_numbers = #tpu.dot_dimension_numbers<[1], [0], [0], [1], [0, 0, 1, 1], [], []>} : vector<2x32xf32>, vector<32x32xf32>, vector<2x32xf32> -> vector<2x32xf32>
    %60 = arith.addf %57, %59 : vector<2x32xf32>
    %61 = math.tanh %60 : vector<2x32xf32>
    %62 = arith.mulf %55, %44 : vector<2x32xf32>
    %cst_28 = arith.constant 1.000000e+00 : f32
    %63 = vector.broadcast %cst_28 : f32 to vector<2x32xf32>
    %64 = arith.subf %63, %55 : vector<2x32xf32>
    %65 = arith.mulf %64, %61 : vector<2x32xf32>
    %66 = arith.addf %62, %65 : vector<2x32xf32>
    %c0_29 = arith.constant 0 : index
    %c7 = arith.constant 7 : index
    %c0_30 = arith.constant 0 : index
    %67 = vector.load %arg8[%c0_29, %c7, %c0_30] : memref<2x8x32xf32, #tpu.memory_space<vmem>>, vector<2x1x32xf32>
    %68 = vector.shape_cast %67 : vector<2x1x32xf32> to vector<2x32xf32>
    %69 = vector.shape_cast %66 : vector<2x32xf32> to vector<2x1x32xf32>
    tpu.vector_store %arg8[%c0_29, %c7, %c0_30], %69 {strides = array<i32>} : memref<2x8x32xf32, #tpu.memory_space<vmem>>, vector<2x1x32xf32>,
    %70 = vector.extract_strided_slice %27 {offsets = [0, 0, 7], sizes = [2, 8, 1], strides = [1, 1, 1]} : vector<2x8x8xf32> to vector<2x8x1xf32>
    %71 = vector.shape_cast %70 : vector<2x8x1xf32> to vector<2x8xf32>
    %72 = vector.shape_cast %71 : vector<2x8xf32> to vector<2x8x1xf32>
    %73 = vector.shape_cast %66 : vector<2x32xf32> to vector<2x1x32xf32>
    %74 = vector.broadcast %72 : vector<2x8x1xf32> to vector<2x8x32xf32>
    %75 = vector.broadcast %73 : vector<2x1x32xf32> to vector<2x8x32xf32>
    %76 = arith.mulf %74, %75 : vector<2x8x32xf32>
    %77 = arith.addf %39, %76 : vector<2x8x32xf32>
    %78 = vector.extract_strided_slice %36 {offsets = [0, 6, 0], sizes = [2, 1, 32], strides = [1, 1, 1]} : vector<2x8x32xf32> to vector<2x1x32xf32>
    %79 = vector.shape_cast %78 : vector<2x1x32xf32> to vector<2x32xf32>
    %80 = vector.extract_strided_slice %77 {offsets = [0, 6, 0], sizes = [2, 1, 32], strides = [1, 1, 1]} : vector<2x8x32xf32> to vector<2x1x32xf32>
    %81 = vector.shape_cast %80 : vector<2x1x32xf32> to vector<2x32xf32>
    %82 = arith.addf %79, %81 : vector<2x32xf32>
    %83 = vector.extract_strided_slice %11 {offsets = [0, 6, 0], sizes = [2, 1, 64], strides = [1, 1, 1]} : vector<2x8x64xf32> to vector<2x1x64xf32>
    %84 = vector.shape_cast %83 : vector<2x1x64xf32> to vector<2x64xf32>
    %cst_31 = arith.constant dense<0.000000e+00> : vector<2x64xf32>
    %85 = tpu.matmul %82, %37, %cst_31 {dimension_numbers = #tpu.dot_dimension_numbers<[1], [0], [0], [1], [0, 0, 1, 1], [], []>} : vector<2x32xf32>, vector<32x64xf32>, vector<2x64xf32> -> vector<2x64xf32>
    %86 = arith.addf %84, %85 : vector<2x64xf32>
    %87 = arith.negf %86 : vector<2x64xf32>
    %88 = math.exp %87 : vector<2x64xf32>
    %cst_32 = arith.constant 1.000000e+00 : f32
    %89 = vector.broadcast %cst_32 : f32 to vector<2x64xf32>
    %90 = arith.addf %89, %88 : vector<2x64xf32>
    %91 = arith.divf %89, %90 : vector<2x64xf32>
    %92 = vector.extract_strided_slice %91 {offsets = [0, 0], sizes = [2, 32], strides = [1, 1]} : vector<2x64xf32> to vector<2x32xf32>
    %93 = vector.extract_strided_slice %91 {offsets = [0, 32], sizes = [2, 32], strides = [1, 1]} : vector<2x64xf32> to vector<2x32xf32>
    %94 = vector.extract_strided_slice %12 {offsets = [0, 6, 0], sizes = [2, 1, 32], strides = [1, 1, 1]} : vector<2x8x32xf32> to vector<2x1x32xf32>
    %95 = vector.shape_cast %94 : vector<2x1x32xf32> to vector<2x32xf32>
    %96 = arith.mulf %92, %82 : vector<2x32xf32>
    %cst_33 = arith.constant dense<0.000000e+00> : vector<2x32xf32>
    %97 = tpu.matmul %96, %38, %cst_33 {dimension_numbers = #tpu.dot_dimension_numbers<[1], [0], [0], [1], [0, 0, 1, 1], [], []>} : vector<2x32xf32>, vector<32x32xf32>, vector<2x32xf32> -> vector<2x32xf32>
    %98 = arith.addf %95, %97 : vector<2x32xf32>
    %99 = math.tanh %98 : vector<2x32xf32>
    %100 = arith.mulf %93, %82 : vector<2x32xf32>
    %cst_34 = arith.constant 1.000000e+00 : f32
    %101 = vector.broadcast %cst_34 : f32 to vector<2x32xf32>
    %102 = arith.subf %101, %93 : vector<2x32xf32>
    %103 = arith.mulf %102, %99 : vector<2x32xf32>
    %104 = arith.addf %100, %103 : vector<2x32xf32>
    %c0_35 = arith.constant 0 : index
    %c6 = arith.constant 6 : index
    %c0_36 = arith.constant 0 : index
    %105 = vector.load %arg8[%c0_35, %c6, %c0_36] : memref<2x8x32xf32, #tpu.memory_space<vmem>>, vector<2x1x32xf32>
    %106 = vector.shape_cast %105 : vector<2x1x32xf32> to vector<2x32xf32>
    %107 = vector.shape_cast %104 : vector<2x32xf32> to vector<2x1x32xf32>
    tpu.vector_store %arg8[%c0_35, %c6, %c0_36], %107 {strides = array<i32>} : memref<2x8x32xf32, #tpu.memory_space<vmem>>, vector<2x1x32xf32>,
    %108 = vector.extract_strided_slice %27 {offsets = [0, 0, 6], sizes = [2, 8, 1], strides = [1, 1, 1]} : vector<2x8x8xf32> to vector<2x8x1xf32>
    %109 = vector.shape_cast %108 : vector<2x8x1xf32> to vector<2x8xf32>
    %110 = vector.shape_cast %109 : vector<2x8xf32> to vector<2x8x1xf32>
    %111 = vector.shape_cast %104 : vector<2x32xf32> to vector<2x1x32xf32>
    %112 = vector.broadcast %110 : vector<2x8x1xf32> to vector<2x8x32xf32>
    %113 = vector.broadcast %111 : vector<2x1x32xf32> to vector<2x8x32xf32>
    %114 = arith.mulf %112, %113 : vector<2x8x32xf32>
    %115 = arith.addf %77, %114 : vector<2x8x32xf32>
    %116 = vector.extract_strided_slice %36 {offsets = [0, 5, 0], sizes = [2, 1, 32], strides = [1, 1, 1]} : vector<2x8x32xf32> to vector<2x1x32xf32>
    %117 = vector.shape_cast %116 : vector<2x1x32xf32> to vector<2x32xf32>
    %118 = vector.extract_strided_slice %115 {offsets = [0, 5, 0], sizes = [2, 1, 32], strides = [1, 1, 1]} : vector<2x8x32xf32> to vector<2x1x32xf32>
    %119 = vector.shape_cast %118 : vector<2x1x32xf32> to vector<2x32xf32>
    %120 = arith.addf %117, %119 : vector<2x32xf32>
    %121 = vector.extract_strided_slice %11 {offsets = [0, 5, 0], sizes = [2, 1, 64], strides = [1, 1, 1]} : vector<2x8x64xf32> to vector<2x1x64xf32>
    %122 = vector.shape_cast %121 : vector<2x1x64xf32> to vector<2x64xf32>
    %cst_37 = arith.constant dense<0.000000e+00> : vector<2x64xf32>
    %123 = tpu.matmul %120, %37, %cst_37 {dimension_numbers = #tpu.dot_dimension_numbers<[1], [0], [0], [1], [0, 0, 1, 1], [], []>} : vector<2x32xf32>, vector<32x64xf32>, vector<2x64xf32> -> vector<2x64xf32>
    %124 = arith.addf %122, %123 : vector<2x64xf32>
    %125 = arith.negf %124 : vector<2x64xf32>
    %126 = math.exp %125 : vector<2x64xf32>
    %cst_38 = arith.constant 1.000000e+00 : f32
    %127 = vector.broadcast %cst_38 : f32 to vector<2x64xf32>
    %128 = arith.addf %127, %126 : vector<2x64xf32>
    %129 = arith.divf %127, %128 : vector<2x64xf32>
    %130 = vector.extract_strided_slice %129 {offsets = [0, 0], sizes = [2, 32], strides = [1, 1]} : vector<2x64xf32> to vector<2x32xf32>
    %131 = vector.extract_strided_slice %129 {offsets = [0, 32], sizes = [2, 32], strides = [1, 1]} : vector<2x64xf32> to vector<2x32xf32>
    %132 = vector.extract_strided_slice %12 {offsets = [0, 5, 0], sizes = [2, 1, 32], strides = [1, 1, 1]} : vector<2x8x32xf32> to vector<2x1x32xf32>
    %133 = vector.shape_cast %132 : vector<2x1x32xf32> to vector<2x32xf32>
    %134 = arith.mulf %130, %120 : vector<2x32xf32>
    %cst_39 = arith.constant dense<0.000000e+00> : vector<2x32xf32>
    %135 = tpu.matmul %134, %38, %cst_39 {dimension_numbers = #tpu.dot_dimension_numbers<[1], [0], [0], [1], [0, 0, 1, 1], [], []>} : vector<2x32xf32>, vector<32x32xf32>, vector<2x32xf32> -> vector<2x32xf32>
    %136 = arith.addf %133, %135 : vector<2x32xf32>
    %137 = math.tanh %136 : vector<2x32xf32>
    %138 = arith.mulf %131, %120 : vector<2x32xf32>
    %cst_40 = arith.constant 1.000000e+00 : f32
    %139 = vector.broadcast %cst_40 : f32 to vector<2x32xf32>
    %140 = arith.subf %139, %131 : vector<2x32xf32>
    %141 = arith.mulf %140, %137 : vector<2x32xf32>
    %142 = arith.addf %138, %141 : vector<2x32xf32>
    %c0_41 = arith.constant 0 : index
    %c5 = arith.constant 5 : index
    %c0_42 = arith.constant 0 : index
    %143 = vector.load %arg8[%c0_41, %c5, %c0_42] : memref<2x8x32xf32, #tpu.memory_space<vmem>>, vector<2x1x32xf32>
    %144 = vector.shape_cast %143 : vector<2x1x32xf32> to vector<2x32xf32>
    %145 = vector.shape_cast %142 : vector<2x32xf32> to vector<2x1x32xf32>
    tpu.vector_store %arg8[%c0_41, %c5, %c0_42], %145 {strides = array<i32>} : memref<2x8x32xf32, #tpu.memory_space<vmem>>, vector<2x1x32xf32>,
    %146 = vector.extract_strided_slice %27 {offsets = [0, 0, 5], sizes = [2, 8, 1], strides = [1, 1, 1]} : vector<2x8x8xf32> to vector<2x8x1xf32>
    %147 = vector.shape_cast %146 : vector<2x8x1xf32> to vector<2x8xf32>
    %148 = vector.shape_cast %147 : vector<2x8xf32> to vector<2x8x1xf32>
    %149 = vector.shape_cast %142 : vector<2x32xf32> to vector<2x1x32xf32>
    %150 = vector.broadcast %148 : vector<2x8x1xf32> to vector<2x8x32xf32>
    %151 = vector.broadcast %149 : vector<2x1x32xf32> to vector<2x8x32xf32>
    %152 = arith.mulf %150, %151 : vector<2x8x32xf32>
    %153 = arith.addf %115, %152 : vector<2x8x32xf32>
    %154 = vector.extract_strided_slice %36 {offsets = [0, 4, 0], sizes = [2, 1, 32], strides = [1, 1, 1]} : vector<2x8x32xf32> to vector<2x1x32xf32>
    %155 = vector.shape_cast %154 : vector<2x1x32xf32> to vector<2x32xf32>
    %156 = vector.extract_strided_slice %153 {offsets = [0, 4, 0], sizes = [2, 1, 32], strides = [1, 1, 1]} : vector<2x8x32xf32> to vector<2x1x32xf32>
    %157 = vector.shape_cast %156 : vector<2x1x32xf32> to vector<2x32xf32>
    %158 = arith.addf %155, %157 : vector<2x32xf32>
    %159 = vector.extract_strided_slice %11 {offsets = [0, 4, 0], sizes = [2, 1, 64], strides = [1, 1, 1]} : vector<2x8x64xf32> to vector<2x1x64xf32>
    %160 = vector.shape_cast %159 : vector<2x1x64xf32> to vector<2x64xf32>
    %cst_43 = arith.constant dense<0.000000e+00> : vector<2x64xf32>
    %161 = tpu.matmul %158, %37, %cst_43 {dimension_numbers = #tpu.dot_dimension_numbers<[1], [0], [0], [1], [0, 0, 1, 1], [], []>} : vector<2x32xf32>, vector<32x64xf32>, vector<2x64xf32> -> vector<2x64xf32>
    %162 = arith.addf %160, %161 : vector<2x64xf32>
    %163 = arith.negf %162 : vector<2x64xf32>
    %164 = math.exp %163 : vector<2x64xf32>
    %cst_44 = arith.constant 1.000000e+00 : f32
    %165 = vector.broadcast %cst_44 : f32 to vector<2x64xf32>
    %166 = arith.addf %165, %164 : vector<2x64xf32>
    %167 = arith.divf %165, %166 : vector<2x64xf32>
    %168 = vector.extract_strided_slice %167 {offsets = [0, 0], sizes = [2, 32], strides = [1, 1]} : vector<2x64xf32> to vector<2x32xf32>
    %169 = vector.extract_strided_slice %167 {offsets = [0, 32], sizes = [2, 32], strides = [1, 1]} : vector<2x64xf32> to vector<2x32xf32>
    %170 = vector.extract_strided_slice %12 {offsets = [0, 4, 0], sizes = [2, 1, 32], strides = [1, 1, 1]} : vector<2x8x32xf32> to vector<2x1x32xf32>
    %171 = vector.shape_cast %170 : vector<2x1x32xf32> to vector<2x32xf32>
    %172 = arith.mulf %168, %158 : vector<2x32xf32>
    %cst_45 = arith.constant dense<0.000000e+00> : vector<2x32xf32>
    %173 = tpu.matmul %172, %38, %cst_45 {dimension_numbers = #tpu.dot_dimension_numbers<[1], [0], [0], [1], [0, 0, 1, 1], [], []>} : vector<2x32xf32>, vector<32x32xf32>, vector<2x32xf32> -> vector<2x32xf32>
    %174 = arith.addf %171, %173 : vector<2x32xf32>
    %175 = math.tanh %174 : vector<2x32xf32>
    %176 = arith.mulf %169, %158 : vector<2x32xf32>
    %cst_46 = arith.constant 1.000000e+00 : f32
    %177 = vector.broadcast %cst_46 : f32 to vector<2x32xf32>
    %178 = arith.subf %177, %169 : vector<2x32xf32>
    %179 = arith.mulf %178, %175 : vector<2x32xf32>
    %180 = arith.addf %176, %179 : vector<2x32xf32>
    %c0_47 = arith.constant 0 : index
    %c4 = arith.constant 4 : index
    %c0_48 = arith.constant 0 : index
    %181 = vector.load %arg8[%c0_47, %c4, %c0_48] : memref<2x8x32xf32, #tpu.memory_space<vmem>>, vector<2x1x32xf32>
    %182 = vector.shape_cast %181 : vector<2x1x32xf32> to vector<2x32xf32>
    %183 = vector.shape_cast %180 : vector<2x32xf32> to vector<2x1x32xf32>
    tpu.vector_store %arg8[%c0_47, %c4, %c0_48], %183 {strides = array<i32>} : memref<2x8x32xf32, #tpu.memory_space<vmem>>, vector<2x1x32xf32>,
    %184 = vector.extract_strided_slice %27 {offsets = [0, 0, 4], sizes = [2, 8, 1], strides = [1, 1, 1]} : vector<2x8x8xf32> to vector<2x8x1xf32>
    %185 = vector.shape_cast %184 : vector<2x8x1xf32> to vector<2x8xf32>
    %186 = vector.shape_cast %185 : vector<2x8xf32> to vector<2x8x1xf32>
    %187 = vector.shape_cast %180 : vector<2x32xf32> to vector<2x1x32xf32>
    %188 = vector.broadcast %186 : vector<2x8x1xf32> to vector<2x8x32xf32>
    %189 = vector.broadcast %187 : vector<2x1x32xf32> to vector<2x8x32xf32>
    %190 = arith.mulf %188, %189 : vector<2x8x32xf32>
    %191 = arith.addf %153, %190 : vector<2x8x32xf32>
    %192 = vector.extract_strided_slice %36 {offsets = [0, 3, 0], sizes = [2, 1, 32], strides = [1, 1, 1]} : vector<2x8x32xf32> to vector<2x1x32xf32>
    %193 = vector.shape_cast %192 : vector<2x1x32xf32> to vector<2x32xf32>
    %194 = vector.extract_strided_slice %191 {offsets = [0, 3, 0], sizes = [2, 1, 32], strides = [1, 1, 1]} : vector<2x8x32xf32> to vector<2x1x32xf32>
    %195 = vector.shape_cast %194 : vector<2x1x32xf32> to vector<2x32xf32>
    %196 = arith.addf %193, %195 : vector<2x32xf32>
    %197 = vector.extract_strided_slice %11 {offsets = [0, 3, 0], sizes = [2, 1, 64], strides = [1, 1, 1]} : vector<2x8x64xf32> to vector<2x1x64xf32>
    %198 = vector.shape_cast %197 : vector<2x1x64xf32> to vector<2x64xf32>
    %cst_49 = arith.constant dense<0.000000e+00> : vector<2x64xf32>
    %199 = tpu.matmul %196, %37, %cst_49 {dimension_numbers = #tpu.dot_dimension_numbers<[1], [0], [0], [1], [0, 0, 1, 1], [], []>} : vector<2x32xf32>, vector<32x64xf32>, vector<2x64xf32> -> vector<2x64xf32>
    %200 = arith.addf %198, %199 : vector<2x64xf32>
    %201 = arith.negf %200 : vector<2x64xf32>
    %202 = math.exp %201 : vector<2x64xf32>
    %cst_50 = arith.constant 1.000000e+00 : f32
    %203 = vector.broadcast %cst_50 : f32 to vector<2x64xf32>
    %204 = arith.addf %203, %202 : vector<2x64xf32>
    %205 = arith.divf %203, %204 : vector<2x64xf32>
    %206 = vector.extract_strided_slice %205 {offsets = [0, 0], sizes = [2, 32], strides = [1, 1]} : vector<2x64xf32> to vector<2x32xf32>
    %207 = vector.extract_strided_slice %205 {offsets = [0, 32], sizes = [2, 32], strides = [1, 1]} : vector<2x64xf32> to vector<2x32xf32>
    %208 = vector.extract_strided_slice %12 {offsets = [0, 3, 0], sizes = [2, 1, 32], strides = [1, 1, 1]} : vector<2x8x32xf32> to vector<2x1x32xf32>
    %209 = vector.shape_cast %208 : vector<2x1x32xf32> to vector<2x32xf32>
    %210 = arith.mulf %206, %196 : vector<2x32xf32>
    %cst_51 = arith.constant dense<0.000000e+00> : vector<2x32xf32>
    %211 = tpu.matmul %210, %38, %cst_51 {dimension_numbers = #tpu.dot_dimension_numbers<[1], [0], [0], [1], [0, 0, 1, 1], [], []>} : vector<2x32xf32>, vector<32x32xf32>, vector<2x32xf32> -> vector<2x32xf32>
    %212 = arith.addf %209, %211 : vector<2x32xf32>
    %213 = math.tanh %212 : vector<2x32xf32>
    %214 = arith.mulf %207, %196 : vector<2x32xf32>
    %cst_52 = arith.constant 1.000000e+00 : f32
    %215 = vector.broadcast %cst_52 : f32 to vector<2x32xf32>
    %216 = arith.subf %215, %207 : vector<2x32xf32>
    %217 = arith.mulf %216, %213 : vector<2x32xf32>
    %218 = arith.addf %214, %217 : vector<2x32xf32>
    %c0_53 = arith.constant 0 : index
    %c3 = arith.constant 3 : index
    %c0_54 = arith.constant 0 : index
    %219 = vector.load %arg8[%c0_53, %c3, %c0_54] : memref<2x8x32xf32, #tpu.memory_space<vmem>>, vector<2x1x32xf32>
    %220 = vector.shape_cast %219 : vector<2x1x32xf32> to vector<2x32xf32>
    %221 = vector.shape_cast %218 : vector<2x32xf32> to vector<2x1x32xf32>
    tpu.vector_store %arg8[%c0_53, %c3, %c0_54], %221 {strides = array<i32>} : memref<2x8x32xf32, #tpu.memory_space<vmem>>, vector<2x1x32xf32>,
    %222 = vector.extract_strided_slice %27 {offsets = [0, 0, 3], sizes = [2, 8, 1], strides = [1, 1, 1]} : vector<2x8x8xf32> to vector<2x8x1xf32>
    %223 = vector.shape_cast %222 : vector<2x8x1xf32> to vector<2x8xf32>
    %224 = vector.shape_cast %223 : vector<2x8xf32> to vector<2x8x1xf32>
    %225 = vector.shape_cast %218 : vector<2x32xf32> to vector<2x1x32xf32>
    %226 = vector.broadcast %224 : vector<2x8x1xf32> to vector<2x8x32xf32>
    %227 = vector.broadcast %225 : vector<2x1x32xf32> to vector<2x8x32xf32>
    %228 = arith.mulf %226, %227 : vector<2x8x32xf32>
    %229 = arith.addf %191, %228 : vector<2x8x32xf32>
    %230 = vector.extract_strided_slice %36 {offsets = [0, 2, 0], sizes = [2, 1, 32], strides = [1, 1, 1]} : vector<2x8x32xf32> to vector<2x1x32xf32>
    %231 = vector.shape_cast %230 : vector<2x1x32xf32> to vector<2x32xf32>
    %232 = vector.extract_strided_slice %229 {offsets = [0, 2, 0], sizes = [2, 1, 32], strides = [1, 1, 1]} : vector<2x8x32xf32> to vector<2x1x32xf32>
    %233 = vector.shape_cast %232 : vector<2x1x32xf32> to vector<2x32xf32>
    %234 = arith.addf %231, %233 : vector<2x32xf32>
    %235 = vector.extract_strided_slice %11 {offsets = [0, 2, 0], sizes = [2, 1, 64], strides = [1, 1, 1]} : vector<2x8x64xf32> to vector<2x1x64xf32>
    %236 = vector.shape_cast %235 : vector<2x1x64xf32> to vector<2x64xf32>
    %cst_55 = arith.constant dense<0.000000e+00> : vector<2x64xf32>
    %237 = tpu.matmul %234, %37, %cst_55 {dimension_numbers = #tpu.dot_dimension_numbers<[1], [0], [0], [1], [0, 0, 1, 1], [], []>} : vector<2x32xf32>, vector<32x64xf32>, vector<2x64xf32> -> vector<2x64xf32>
    %238 = arith.addf %236, %237 : vector<2x64xf32>
    %239 = arith.negf %238 : vector<2x64xf32>
    %240 = math.exp %239 : vector<2x64xf32>
    %cst_56 = arith.constant 1.000000e+00 : f32
    %241 = vector.broadcast %cst_56 : f32 to vector<2x64xf32>
    %242 = arith.addf %241, %240 : vector<2x64xf32>
    %243 = arith.divf %241, %242 : vector<2x64xf32>
    %244 = vector.extract_strided_slice %243 {offsets = [0, 0], sizes = [2, 32], strides = [1, 1]} : vector<2x64xf32> to vector<2x32xf32>
    %245 = vector.extract_strided_slice %243 {offsets = [0, 32], sizes = [2, 32], strides = [1, 1]} : vector<2x64xf32> to vector<2x32xf32>
    %246 = vector.extract_strided_slice %12 {offsets = [0, 2, 0], sizes = [2, 1, 32], strides = [1, 1, 1]} : vector<2x8x32xf32> to vector<2x1x32xf32>
    %247 = vector.shape_cast %246 : vector<2x1x32xf32> to vector<2x32xf32>
    %248 = arith.mulf %244, %234 : vector<2x32xf32>
    %cst_57 = arith.constant dense<0.000000e+00> : vector<2x32xf32>
    %249 = tpu.matmul %248, %38, %cst_57 {dimension_numbers = #tpu.dot_dimension_numbers<[1], [0], [0], [1], [0, 0, 1, 1], [], []>} : vector<2x32xf32>, vector<32x32xf32>, vector<2x32xf32> -> vector<2x32xf32>
    %250 = arith.addf %247, %249 : vector<2x32xf32>
    %251 = math.tanh %250 : vector<2x32xf32>
    %252 = arith.mulf %245, %234 : vector<2x32xf32>
    %cst_58 = arith.constant 1.000000e+00 : f32
    %253 = vector.broadcast %cst_58 : f32 to vector<2x32xf32>
    %254 = arith.subf %253, %245 : vector<2x32xf32>
    %255 = arith.mulf %254, %251 : vector<2x32xf32>
    %256 = arith.addf %252, %255 : vector<2x32xf32>
    %c0_59 = arith.constant 0 : index
    %c2 = arith.constant 2 : index
    %c0_60 = arith.constant 0 : index
    %257 = vector.load %arg8[%c0_59, %c2, %c0_60] : memref<2x8x32xf32, #tpu.memory_space<vmem>>, vector<2x1x32xf32>
    %258 = vector.shape_cast %257 : vector<2x1x32xf32> to vector<2x32xf32>
    %259 = vector.shape_cast %256 : vector<2x32xf32> to vector<2x1x32xf32>
    tpu.vector_store %arg8[%c0_59, %c2, %c0_60], %259 {strides = array<i32>} : memref<2x8x32xf32, #tpu.memory_space<vmem>>, vector<2x1x32xf32>,
    %260 = vector.extract_strided_slice %27 {offsets = [0, 0, 2], sizes = [2, 8, 1], strides = [1, 1, 1]} : vector<2x8x8xf32> to vector<2x8x1xf32>
    %261 = vector.shape_cast %260 : vector<2x8x1xf32> to vector<2x8xf32>
    %262 = vector.shape_cast %261 : vector<2x8xf32> to vector<2x8x1xf32>
    %263 = vector.shape_cast %256 : vector<2x32xf32> to vector<2x1x32xf32>
    %264 = vector.broadcast %262 : vector<2x8x1xf32> to vector<2x8x32xf32>
    %265 = vector.broadcast %263 : vector<2x1x32xf32> to vector<2x8x32xf32>
    %266 = arith.mulf %264, %265 : vector<2x8x32xf32>
    %267 = arith.addf %229, %266 : vector<2x8x32xf32>
    %268 = vector.extract_strided_slice %36 {offsets = [0, 1, 0], sizes = [2, 1, 32], strides = [1, 1, 1]} : vector<2x8x32xf32> to vector<2x1x32xf32>
    %269 = vector.shape_cast %268 : vector<2x1x32xf32> to vector<2x32xf32>
    %270 = vector.extract_strided_slice %267 {offsets = [0, 1, 0], sizes = [2, 1, 32], strides = [1, 1, 1]} : vector<2x8x32xf32> to vector<2x1x32xf32>
    %271 = vector.shape_cast %270 : vector<2x1x32xf32> to vector<2x32xf32>
    %272 = arith.addf %269, %271 : vector<2x32xf32>
    %273 = vector.extract_strided_slice %11 {offsets = [0, 1, 0], sizes = [2, 1, 64], strides = [1, 1, 1]} : vector<2x8x64xf32> to vector<2x1x64xf32>
    %274 = vector.shape_cast %273 : vector<2x1x64xf32> to vector<2x64xf32>
    %cst_61 = arith.constant dense<0.000000e+00> : vector<2x64xf32>
    %275 = tpu.matmul %272, %37, %cst_61 {dimension_numbers = #tpu.dot_dimension_numbers<[1], [0], [0], [1], [0, 0, 1, 1], [], []>} : vector<2x32xf32>, vector<32x64xf32>, vector<2x64xf32> -> vector<2x64xf32>
    %276 = arith.addf %274, %275 : vector<2x64xf32>
    %277 = arith.negf %276 : vector<2x64xf32>
    %278 = math.exp %277 : vector<2x64xf32>
    %cst_62 = arith.constant 1.000000e+00 : f32
    %279 = vector.broadcast %cst_62 : f32 to vector<2x64xf32>
    %280 = arith.addf %279, %278 : vector<2x64xf32>
    %281 = arith.divf %279, %280 : vector<2x64xf32>
    %282 = vector.extract_strided_slice %281 {offsets = [0, 0], sizes = [2, 32], strides = [1, 1]} : vector<2x64xf32> to vector<2x32xf32>
    %283 = vector.extract_strided_slice %281 {offsets = [0, 32], sizes = [2, 32], strides = [1, 1]} : vector<2x64xf32> to vector<2x32xf32>
    %284 = vector.extract_strided_slice %12 {offsets = [0, 1, 0], sizes = [2, 1, 32], strides = [1, 1, 1]} : vector<2x8x32xf32> to vector<2x1x32xf32>
    %285 = vector.shape_cast %284 : vector<2x1x32xf32> to vector<2x32xf32>
    %286 = arith.mulf %282, %272 : vector<2x32xf32>
    %cst_63 = arith.constant dense<0.000000e+00> : vector<2x32xf32>
    %287 = tpu.matmul %286, %38, %cst_63 {dimension_numbers = #tpu.dot_dimension_numbers<[1], [0], [0], [1], [0, 0, 1, 1], [], []>} : vector<2x32xf32>, vector<32x32xf32>, vector<2x32xf32> -> vector<2x32xf32>
    %288 = arith.addf %285, %287 : vector<2x32xf32>
    %289 = math.tanh %288 : vector<2x32xf32>
    %290 = arith.mulf %283, %272 : vector<2x32xf32>
    %cst_64 = arith.constant 1.000000e+00 : f32
    %291 = vector.broadcast %cst_64 : f32 to vector<2x32xf32>
    %292 = arith.subf %291, %283 : vector<2x32xf32>
    %293 = arith.mulf %292, %289 : vector<2x32xf32>
    %294 = arith.addf %290, %293 : vector<2x32xf32>
    %c0_65 = arith.constant 0 : index
    %c1 = arith.constant 1 : index
    %c0_66 = arith.constant 0 : index
    %295 = vector.load %arg8[%c0_65, %c1, %c0_66] : memref<2x8x32xf32, #tpu.memory_space<vmem>>, vector<2x1x32xf32>
    %296 = vector.shape_cast %295 : vector<2x1x32xf32> to vector<2x32xf32>
    %297 = vector.shape_cast %294 : vector<2x32xf32> to vector<2x1x32xf32>
    tpu.vector_store %arg8[%c0_65, %c1, %c0_66], %297 {strides = array<i32>} : memref<2x8x32xf32, #tpu.memory_space<vmem>>, vector<2x1x32xf32>,
    %298 = vector.extract_strided_slice %27 {offsets = [0, 0, 1], sizes = [2, 8, 1], strides = [1, 1, 1]} : vector<2x8x8xf32> to vector<2x8x1xf32>
    %299 = vector.shape_cast %298 : vector<2x8x1xf32> to vector<2x8xf32>
    %300 = vector.shape_cast %299 : vector<2x8xf32> to vector<2x8x1xf32>
    %301 = vector.shape_cast %294 : vector<2x32xf32> to vector<2x1x32xf32>
    %302 = vector.broadcast %300 : vector<2x8x1xf32> to vector<2x8x32xf32>
    %303 = vector.broadcast %301 : vector<2x1x32xf32> to vector<2x8x32xf32>
    %304 = arith.mulf %302, %303 : vector<2x8x32xf32>
    %305 = arith.addf %267, %304 : vector<2x8x32xf32>
    %306 = vector.extract_strided_slice %36 {offsets = [0, 0, 0], sizes = [2, 1, 32], strides = [1, 1, 1]} : vector<2x8x32xf32> to vector<2x1x32xf32>
    %307 = vector.shape_cast %306 : vector<2x1x32xf32> to vector<2x32xf32>
    %308 = vector.extract_strided_slice %305 {offsets = [0, 0, 0], sizes = [2, 1, 32], strides = [1, 1, 1]} : vector<2x8x32xf32> to vector<2x1x32xf32>
    %309 = vector.shape_cast %308 : vector<2x1x32xf32> to vector<2x32xf32>
    %310 = arith.addf %307, %309 : vector<2x32xf32>
    %311 = vector.extract_strided_slice %11 {offsets = [0, 0, 0], sizes = [2, 1, 64], strides = [1, 1, 1]} : vector<2x8x64xf32> to vector<2x1x64xf32>
    %312 = vector.shape_cast %311 : vector<2x1x64xf32> to vector<2x64xf32>
    %cst_67 = arith.constant dense<0.000000e+00> : vector<2x64xf32>
    %313 = tpu.matmul %310, %37, %cst_67 {dimension_numbers = #tpu.dot_dimension_numbers<[1], [0], [0], [1], [0, 0, 1, 1], [], []>} : vector<2x32xf32>, vector<32x64xf32>, vector<2x64xf32> -> vector<2x64xf32>
    %314 = arith.addf %312, %313 : vector<2x64xf32>
    %315 = arith.negf %314 : vector<2x64xf32>
    %316 = math.exp %315 : vector<2x64xf32>
    %cst_68 = arith.constant 1.000000e+00 : f32
    %317 = vector.broadcast %cst_68 : f32 to vector<2x64xf32>
    %318 = arith.addf %317, %316 : vector<2x64xf32>
    %319 = arith.divf %317, %318 : vector<2x64xf32>
    %320 = vector.extract_strided_slice %319 {offsets = [0, 0], sizes = [2, 32], strides = [1, 1]} : vector<2x64xf32> to vector<2x32xf32>
    %321 = vector.extract_strided_slice %319 {offsets = [0, 32], sizes = [2, 32], strides = [1, 1]} : vector<2x64xf32> to vector<2x32xf32>
    %322 = vector.extract_strided_slice %12 {offsets = [0, 0, 0], sizes = [2, 1, 32], strides = [1, 1, 1]} : vector<2x8x32xf32> to vector<2x1x32xf32>
    %323 = vector.shape_cast %322 : vector<2x1x32xf32> to vector<2x32xf32>
    %324 = arith.mulf %320, %310 : vector<2x32xf32>
    %cst_69 = arith.constant dense<0.000000e+00> : vector<2x32xf32>
    %325 = tpu.matmul %324, %38, %cst_69 {dimension_numbers = #tpu.dot_dimension_numbers<[1], [0], [0], [1], [0, 0, 1, 1], [], []>} : vector<2x32xf32>, vector<32x32xf32>, vector<2x32xf32> -> vector<2x32xf32>
    %326 = arith.addf %323, %325 : vector<2x32xf32>
    %327 = math.tanh %326 : vector<2x32xf32>
    %328 = arith.mulf %321, %310 : vector<2x32xf32>
    %cst_70 = arith.constant 1.000000e+00 : f32
    %329 = vector.broadcast %cst_70 : f32 to vector<2x32xf32>
    %330 = arith.subf %329, %321 : vector<2x32xf32>
    %331 = arith.mulf %330, %327 : vector<2x32xf32>
    %332 = arith.addf %328, %331 : vector<2x32xf32>
    %c0_71 = arith.constant 0 : index
    %c0_72 = arith.constant 0 : index
    %c0_73 = arith.constant 0 : index
    %333 = vector.load %arg8[%c0_71, %c0_72, %c0_73] : memref<2x8x32xf32, #tpu.memory_space<vmem>>, vector<2x1x32xf32>
    %334 = vector.shape_cast %333 : vector<2x1x32xf32> to vector<2x32xf32>
    %335 = vector.shape_cast %332 : vector<2x32xf32> to vector<2x1x32xf32>
    tpu.vector_store %arg8[%c0_71, %c0_72, %c0_73], %335 {strides = array<i32>} : memref<2x8x32xf32, #tpu.memory_space<vmem>>, vector<2x1x32xf32>,
    return
  }
  func.func @transform_0(%arg0: i32) -> (i32, i32, i32) {
    %c0_i32 = arith.constant 0 : i32
    %c0_i32_0 = arith.constant 0 : i32
    %c0_i32_1 = arith.constant 0 : i32
    return %arg0, %c0_i32, %c0_i32_0 : i32, i32, i32
  }
  func.func @transform_1(%arg0: i32) -> (i32, i32, i32) {
    %c0_i32 = arith.constant 0 : i32
    %c0_i32_0 = arith.constant 0 : i32
    %c0_i32_1 = arith.constant 0 : i32
    return %arg0, %c0_i32, %c0_i32_0 : i32, i32, i32
  }
  func.func @transform_2(%arg0: i32) -> (i32, i32) {
    %c0_i32 = arith.constant 0 : i32
    %c0_i32_0 = arith.constant 0 : i32
    %c0_i32_1 = arith.constant 0 : i32
    return %c0_i32, %c0_i32_0 : i32, i32
  }
  func.func @transform_3(%arg0: i32) -> (i32, i32) {
    %c0_i32 = arith.constant 0 : i32
    %c0_i32_0 = arith.constant 0 : i32
    %c0_i32_1 = arith.constant 0 : i32
    return %c0_i32, %c0_i32_0 : i32, i32
  }
  func.func @transform_4(%arg0: i32) -> (i32, i32) {
    %c0_i32 = arith.constant 0 : i32
    %c0_i32_0 = arith.constant 0 : i32
    %c0_i32_1 = arith.constant 0 : i32
    return %c0_i32, %c0_i32_0 : i32, i32
  }
  func.func @transform_5(%arg0: i32) -> (i32, i32) {
    %c0_i32 = arith.constant 0 : i32
    %c0_i32_0 = arith.constant 0 : i32
    %c0_i32_1 = arith.constant 0 : i32
    return %c0_i32, %c0_i32_0 : i32, i32
  }
  func.func @transform_6(%arg0: i32) -> (i32, i32) {
    %c0_i32 = arith.constant 0 : i32
    %c0_i32_0 = arith.constant 0 : i32
    %c0_i32_1 = arith.constant 0 : i32
    return %c0_i32, %c0_i32_0 : i32, i32
  }
  func.func @transform_7(%arg0: i32) -> (i32, i32, i32) {
    %c0_i32 = arith.constant 0 : i32
    %c0_i32_0 = arith.constant 0 : i32
    %c0_i32_1 = arith.constant 0 : i32
    return %arg0, %c0_i32, %c0_i32_0 : i32, i32, i32
  }
}

</mosaic_0001>

<llo_original>
// kernel: tpu_custom_call.1
$region0: #{tpu_custom_call.1}
  #allocation0 [shape = 'u32[]', space=smem, size = 0x4, offset = 0x4, fixed_abs, tag = 'smem constant byte address 0x4 - core index']
  #allocation1 [shape = 'u32[72,128]{1,0:T(1,128)}', space=vmem, size = 0x9000, scoped, tag = 'internal scratch']
  %s0 = inlined_call_operand.hbm [shape: f32[2,8,16], index: 0, kind: input, shape index: {}]
  %s1 = inlined_call_operand.hbm [shape: f32[2,8,8], index: 1, kind: input, shape index: {}]
  %s2 = inlined_call_operand.hbm [shape: f32[16,32], index: 2, kind: input, shape index: {}]
  %s3 = inlined_call_operand.hbm [shape: f32[16,96], index: 3, kind: input, shape index: {}]
  %s4 = inlined_call_operand.vmem [shape: f32[1,96], index: 4, kind: input, shape index: {}]
  %s5 = inlined_call_operand.hbm [shape: f32[32,64], index: 5, kind: input, shape index: {}]
  %s6 = inlined_call_operand.hbm [shape: f32[32,32], index: 6, kind: input, shape index: {}]
  %s7 = inlined_call_operand.hbm [shape: f32[2,8,32], index: 7, kind: output, shape index: {}]
  %s8 = sld [smem:[#allocation0]]
  $region62: #{tpu_custom_call.1} parent=0
    _
  %s10 = ssub.s32 1, %s8
  %s11 = scalar_select 0, %s10, %s8
  $region1: #{tpu_custom_call.1} parent=0
    #allocation2 [shape = 'u8[8192]{0}', space=vmem, size = 0x2000, scoped, tag = 'input window, operand 0, single buffered']
    #allocation3 [shape = 's32[1]{0}', space=sflag, size = 0x4, scoped, tag = 'scoped memory for tpu_custom_call.1']
    #allocation4 [shape = 's32[1]{0}', space=sflag, size = 0x4, scoped, tag = 'scoped memory for tpu_custom_call.1']
    #allocation5 [shape = 'u8[8192]{0}', space=vmem, size = 0x2000, scoped, tag = 'input window, operand 1, single buffered']
    #allocation6 [shape = 's32[1]{0}', space=sflag, size = 0x4, scoped, tag = 'scoped memory for tpu_custom_call.1']
    #allocation7 [shape = 'u8[8192]{0}', space=vmem, size = 0x2000, scoped, tag = 'input window, operand 2, single buffered']
    #allocation8 [shape = 'u8[8192]{0}', space=vmem, size = 0x2000, scoped, tag = 'input window, operand 3, single buffered']
    #allocation9 [shape = 's32[1]{0}', space=sflag, size = 0x4, scoped, tag = 'scoped memory for tpu_custom_call.1']
    #allocation10 [shape = 'u8[16384]{0}', space=vmem, size = 0x4000, scoped, tag = 'input window, operand 5, single buffered']
    #allocation11 [shape = 'u8[16384]{0}', space=vmem, size = 0x4000, scoped, tag = 'input window, operand 6, single buffered']
    #allocation12 [shape = 's32[1]{0}', space=sflag, size = 0x4, scoped, tag = 'scoped memory for tpu_custom_call.1']
    #allocation13 [shape = 'u8[8192]{0}', space=vmem, size = 0x2000, scoped, tag = 'output window, operand 0, single buffered']
    %12 = vsyncpa [#allocation3], 0
    %13 = vsyncpa [#allocation6], 0
    %14 = vsyncpa [#allocation9], 0
    %15 = vsyncpa [#allocation12], 0
    %16 = vsyncpa [#allocation4], 0
    // Predicated region
    $region2: #{tpu_custom_call.1} parent=1 // pred_check
      _
    $region3: #{tpu_custom_call.1} parent=1 // pred_check_branch
      %18 = sbr.rel (0) target = $region5
    $region4: #{tpu_custom_call.1} parent=1 // pred_region
      %20 = vsyncadd [#allocation3], 0
      %s21 = sshll.u32 %s0, 4
      %s22 = int_to_ptr.hbm [resolvable:$true] %s21
      %s23 = sshll.u32 [#allocation2], 4
      %s24 = int_to_ptr.vmem [resolvable:$true] %s23
      %29 = dma.hbm_to_vmem [thread:$0]  %s22, 256, %s24, [#allocation3], 128, 128, 8
    $region5: #{tpu_custom_call.1} parent=1 // pred_fallthru
      _
    // Predicated region
    $region6: #{tpu_custom_call.1} parent=1 // pred_check
      _
    $region7: #{tpu_custom_call.1} parent=1 // pred_check_branch
      %31 = sbr.rel (0) target = $region9
    $region8: #{tpu_custom_call.1} parent=1 // pred_region
      %33 = vsyncadd [#allocation6], 0
      %s34 = sshll.u32 %s1, 4
      %s35 = int_to_ptr.hbm [resolvable:$true] %s34
      %s36 = sshll.u32 [#allocation5], 4
      %s37 = int_to_ptr.vmem [resolvable:$true] %s36
      %42 = dma.hbm_to_vmem [thread:$0]  %s35, 256, %s37, [#allocation6], 128, 128, 8
    $region9: #{tpu_custom_call.1} parent=1 // pred_fallthru
      _
    // Predicated region
    $region10: #{tpu_custom_call.1} parent=1 // pred_check
      _
    $region11: #{tpu_custom_call.1} parent=1 // pred_check_branch
      %44 = sbr.rel (0) target = $region13
    $region12: #{tpu_custom_call.1} parent=1 // pred_region
      %46 = vsyncadd [#allocation6], 0
      %s47 = sshll.u32 %s2, 4
      %s48 = int_to_ptr.hbm [resolvable:$true] %s47
      %s49 = sshll.u32 [#allocation7], 4
      %s50 = int_to_ptr.vmem [resolvable:$true] %s49
      %55 = dma.hbm_to_vmem [thread:$0]  %s48, 256, %s50, [#allocation6], 128, 128, 8
    $region13: #{tpu_custom_call.1} parent=1 // pred_fallthru
      _
    // Predicated region
    $region14: #{tpu_custom_call.1} parent=1 // pred_check
      _
    $region15: #{tpu_custom_call.1} parent=1 // pred_check_branch
      %57 = sbr.rel (0) target = $region17
    $region16: #{tpu_custom_call.1} parent=1 // pred_region
      %59 = vsyncadd [#allocation9], 0
      %s60 = sshll.u32 %s3, 4
      %s61 = int_to_ptr.hbm [resolvable:$true] %s60
      %s62 = sshll.u32 [#allocation8], 4
      %s63 = int_to_ptr.vmem [resolvable:$true] %s62
      %68 = dma.hbm_to_vmem [thread:$0]  %s61, 256, %s63, [#allocation9], 128, 128, 8
    $region17: #{tpu_custom_call.1} parent=1 // pred_fallthru
      _
    // Predicated region
    $region18: #{tpu_custom_call.1} parent=1 // pred_check
      _
    $region19: #{tpu_custom_call.1} parent=1 // pred_check_branch
      %70 = sbr.rel (0) target = $region21
    $region20: #{tpu_custom_call.1} parent=1 // pred_region
      _
    $region21: #{tpu_custom_call.1} parent=1 // pred_fallthru
      _
    // Predicated region
    $region22: #{tpu_custom_call.1} parent=1 // pred_check
      _
    $region23: #{tpu_custom_call.1} parent=1 // pred_check_branch
      %72 = sbr.rel (0) target = $region25
    $region24: #{tpu_custom_call.1} parent=1 // pred_region
      %74 = vsyncadd [#allocation9], 0
      %s75 = sshll.u32 %s5, 4
      %s76 = int_to_ptr.hbm [resolvable:$true] %s75
      %s77 = sshll.u32 [#allocation10], 4
      %s78 = int_to_ptr.vmem [resolvable:$true] %s77
      %83 = dma.hbm_to_vmem [thread:$0]  %s76, 512, %s78, [#allocation9], 128, 128, 8
    $region25: #{tpu_custom_call.1} parent=1 // pred_fallthru
      _
    // Predicated region
    $region26: #{tpu_custom_call.1} parent=1 // pred_check
      _
    $region27: #{tpu_custom_call.1} parent=1 // pred_check_branch
      %85 = sbr.rel (0) target = $region29
    $region28: #{tpu_custom_call.1} parent=1 // pred_region
      %87 = vsyncadd [#allocation12], 0
      %s88 = sshll.u32 %s6, 4
      %s89 = int_to_ptr.hbm [resolvable:$true] %s88
      %s90 = sshll.u32 [#allocation11], 4
      %s91 = int_to_ptr.vmem [resolvable:$true] %s90
      %96 = dma.hbm_to_vmem [thread:$0]  %s89, 512, %s91, [#allocation12], 128, 128, 8
    $region29: #{tpu_custom_call.1} parent=1 // pred_fallthru
      _
    // Predicated region
    $region30: #{tpu_custom_call.1} parent=1 // pred_check
      _
    $region31: #{tpu_custom_call.1} parent=1 // pred_check_branch
      %98 = sbr.rel (0) target = $region33
    $region32: #{tpu_custom_call.1} parent=1 // pred_region
      %100 = dma.done [#allocation3], 256
    $region33: #{tpu_custom_call.1} parent=1 // pred_fallthru
      _
    // Predicated region
    $region34: #{tpu_custom_call.1} parent=1 // pred_check
      _
    $region35: #{tpu_custom_call.1} parent=1 // pred_check_branch
      %102 = sbr.rel (0) target = $region37
    $region36: #{tpu_custom_call.1} parent=1 // pred_region
      %104 = dma.done [#allocation6], 256
    $region37: #{tpu_custom_call.1} parent=1 // pred_fallthru
      _
    // Predicated region
    $region38: #{tpu_custom_call.1} parent=1 // pred_check
      _
    $region39: #{tpu_custom_call.1} parent=1 // pred_check_branch
      %106 = sbr.rel (0) target = $region41
    $region40: #{tpu_custom_call.1} parent=1 // pred_region
      %108 = dma.done [#allocation6], 256
    $region41: #{tpu_custom_call.1} parent=1 // pred_fallthru
      _
    // Predicated region
    $region42: #{tpu_custom_call.1} parent=1 // pred_check
      _
    $region43: #{tpu_custom_call.1} parent=1 // pred_check_branch
      %110 = sbr.rel (0) target = $region45
    $region44: #{tpu_custom_call.1} parent=1 // pred_region
      %112 = dma.done [#allocation9], 256
    $region45: #{tpu_custom_call.1} parent=1 // pred_fallthru
      _
    // Predicated region
    $region46: #{tpu_custom_call.1} parent=1 // pred_check
      _
    $region47: #{tpu_custom_call.1} parent=1 // pred_check_branch
      %114 = sbr.rel (0) target = $region49
    $region48: #{tpu_custom_call.1} parent=1 // pred_region
      %116 = dma.done [#allocation9], 512
    $region49: #{tpu_custom_call.1} parent=1 // pred_fallthru
      _
    // Predicated region
    $region50: #{tpu_custom_call.1} parent=1 // pred_check
      _
    $region51: #{tpu_custom_call.1} parent=1 // pred_check_branch
      %118 = sbr.rel (0) target = $region53
    $region52: #{tpu_custom_call.1} parent=1 // pred_region
      %120 = dma.done [#allocation12], 512
    $region53: #{tpu_custom_call.1} parent=1 // pred_fallthru
      _
    %v121 = vld [vmem:[#allocation2] sm:$0xff]
    %v122 = vld [vmem:[#allocation2 + $0x8] sm:$0xff]
    %v123 = vld [vmem:[#allocation7] sm:$0xff]
    %v124 = vld [vmem:[#allocation7 + $0x8] sm:$0xff]
    %vm125 = vcmask 130048
    %v127 = vsel %vm125, %v121, 0
    %v130 = vsel %vm125, %v122, 0
    %132 = vmatpush.msra.mxu0 0.0
    %133 = vmatpush.msra.mxu0 0.0
    %134 = vmatpush.msra.mxu0 0.0
    %135 = vmatpush.msra.mxu0 0.0
    %136 = vmatpush.msra.mxu0 0.0
    %137 = vmatpush.msra.mxu0 0.0
    %138 = vmatpush.msra.mxu0 0.0
    %139 = vmatpush.msra.mxu0 0.0
    %140 = vmatpush.msra.mxu0 0.0
    %141 = vmatpush.msra.mxu0 0.0
    %142 = vmatpush.msra.mxu0 0.0
    %143 = vmatpush.msra.mxu0 0.0
    %144 = vmatpush.msra.mxu0 0.0
    %145 = vmatpush.msra.mxu0 0.0
    %146 = vmatpush.msra.mxu0 %v124
    %147 = vmatpush.msra.mxu0 %v123
    %148 = vmatmul.f32.gmra.mxu0 %v127
    %v149 = vpop.f32.mrf.mxu0
    %v150 = vadd.f32 0.0, %v149
    %151 = vmatmul.f32.gmra.mxu0 %v130
    %v152 = vpop.f32.mrf.mxu0
    %v153 = vadd.f32 0.0, %v152
    %154 = vdwg.mxu0
    %v155 = vld [vmem:[#allocation8] sm:$0xff]
    %v156 = vld [vmem:[#allocation8 + $0x8] sm:$0xff]
    %v157 = vld [vmem:[%s4] sm:$0x1]
    %v159 = vperm.slane %v157, 0
    %161 = vmatpush.msra.mxu0 0.0
    %162 = vmatpush.msra.mxu0 0.0
    %163 = vmatpush.msra.mxu0 0.0
    %164 = vmatpush.msra.mxu0 0.0
    %165 = vmatpush.msra.mxu0 0.0
    %166 = vmatpush.msra.mxu0 0.0
    %167 = vmatpush.msra.mxu0 0.0
    %168 = vmatpush.msra.mxu0 0.0
    %169 = vmatpush.msra.mxu0 0.0
    %170 = vmatpush.msra.mxu0 0.0
    %171 = vmatpush.msra.mxu0 0.0
    %172 = vmatpush.msra.mxu0 0.0
    %173 = vmatpush.msra.mxu0 0.0
    %174 = vmatpush.msra.mxu0 0.0
    %175 = vmatpush.msra.mxu0 %v156
    %176 = vmatpush.msra.mxu0 %v155
    %177 = vmatmul.f32.gmra.mxu0 %v127
    %v178 = vpop.f32.mrf.mxu0
    %v179 = vadd.f32 %v159, %v178
    %180 = vmatmul.f32.gmra.mxu0 %v130
    %v181 = vpop.f32.mrf.mxu0
    %v182 = vadd.f32 %v159, %v181
    %183 = vdwg.mxu0
    %v184 = vld [vmem:[#allocation5] sm:$0xff]
    %v185 = vld [vmem:[#allocation5 + $0x8] sm:$0xff]
    %vm186 = vcmask 64512
    %v187 = vsel %vm186, %v184, 0.0
    %188 = vadd.xlane.f32.xlu0 %v187
    %v189 = vpop.xlane.xlu0 %188
    %v190 = vsel %vm186, %v185, 0.0
    %191 = vadd.xlane.f32.xlu0 %v190
    %v192 = vpop.xlane.xlu0 %191
    %vm193 = vcmp.ne.f32.partialorder %v189, 0.0
    %vm194 = vcmp.ne.f32.partialorder %v192, 0.0
    %v195 = vsel %vm193, %v189, 1.0
    %v196 = vsel %vm194, %v192, 1.0
    %v197 = vrcp.pop %v195
    %v198 = vmul.f32 %v195, %v197
    %v199 = vsub.f32 1.0, %v198
    %v200 = vmul.f32 %v197, %v199
    %v201 = vadd.f32 %v197, %v200
    %vm202 = vweird.f32 %v195
    %vm203 = vweird.f32 %v197
    %vm204 = vmor %vm202, %vm203
    %v205 = vsel %vm204, %v197, %v201
    %v206 = vand.u32 2147483647, %v195
    %vm207 = vcmp.eq.f32.partialorder %v206, 8.507059e+37
    %v208 = vand.u32 %v195, 2147483648
    %v209 = vor.u32 1.1754944e-38, %v208
    %v210 = vsel %vm207, %v209, %v205
    %v211 = vmul.f32 1.0, %v210
    %v212 = vrcp.pop %v196
    %v213 = vmul.f32 %v196, %v212
    %v214 = vsub.f32 1.0, %v213
    %v215 = vmul.f32 %v212, %v214
    %v216 = vadd.f32 %v212, %v215
    %vm217 = vweird.f32 %v196
    %vm218 = vweird.f32 %v212
    %vm219 = vmor %vm217, %vm218
    %v220 = vsel %vm219, %v212, %v216
    %v221 = vand.u32 2147483647, %v196
    %vm222 = vcmp.eq.f32.partialorder %v221, 8.507059e+37
    %v223 = vand.u32 %v196, 2147483648
    %v224 = vor.u32 1.1754944e-38, %v223
    %v225 = vsel %vm222, %v224, %v220
    %v226 = vmul.f32 1.0, %v225
    %v227 = vsel %vm193, %v211, 0.0
    %v228 = vsel %vm194, %v226, 0.0
    %v229 = vmul.f32 %v184, %v227
    %v230 = vmul.f32 %v185, %v228
    %v231 = vlaneseq
    %v232 = vshrl.u32 %v231, 7
    %v233 = vlaneseq
    %v234 = vand.u32 %v233, 127
    %vm235 = vcmp.le.s32.totalorder %v234, %v232
    %v236 = vsel %vm235, 1, 0
    %vm237 = vcmp.eq.s32.totalorder %v236, 1
    %v238 = vsel %vm237, %v229, 0.0
    %v239 = vsel %vm237, %v230, 0.0
    %v241 = vsel %vm186, %v238, 0
    %243 = vmatpush.msra.mxu0 0.0
    %244 = vmatpush.msra.mxu0 0.0
    %245 = vmatpush.msra.mxu0 0.0
    %246 = vmatpush.msra.mxu0 0.0
    %247 = vmatpush.msra.mxu0 0.0
    %248 = vmatpush.msra.mxu0 0.0
    %249 = vmatpush.msra.mxu0 0.0
    %250 = vmatpush.msra.mxu0 0.0
    %251 = vmatpush.msra.mxu0 0.0
    %252 = vmatpush.msra.mxu0 0.0
    %253 = vmatpush.msra.mxu0 0.0
    %254 = vmatpush.msra.mxu0 0.0
    %255 = vmatpush.msra.mxu0 0.0
    %256 = vmatpush.msra.mxu0 0.0
    %257 = vmatpush.msra.mxu0 0.0
    %258 = vmatpush.msra.mxu0 %v150
    %259 = vmatmul.f32.gmra.mxu0 %v241
    %v260 = vpop.f32.mrf.mxu0
    %v261 = vadd.f32 0.0, %v260
    %262 = vdwg.mxu0
    %v264 = vsel %vm186, %v239, 0
    %266 = vmatpush.msra.mxu0 0.0
    %267 = vmatpush.msra.mxu0 0.0
    %268 = vmatpush.msra.mxu0 0.0
    %269 = vmatpush.msra.mxu0 0.0
    %270 = vmatpush.msra.mxu0 0.0
    %271 = vmatpush.msra.mxu0 0.0
    %272 = vmatpush.msra.mxu0 0.0
    %273 = vmatpush.msra.mxu0 0.0
    %274 = vmatpush.msra.mxu0 0.0
    %275 = vmatpush.msra.mxu0 0.0
    %276 = vmatpush.msra.mxu0 0.0
    %277 = vmatpush.msra.mxu0 0.0
    %278 = vmatpush.msra.mxu0 0.0
    %279 = vmatpush.msra.mxu0 0.0
    %280 = vmatpush.msra.mxu0 0.0
    %281 = vmatpush.msra.mxu0 %v153
    %282 = vmatmul.f32.gmra.mxu0 %v264
    %v283 = vpop.f32.mrf.mxu0
    %v284 = vadd.f32 0.0, %v283
    %285 = vdwg.mxu0
    %v286 = vld [vmem:[#allocation10] sm:$0xff]
    %v287 = vld [vmem:[#allocation10 + $0x8] sm:$0xff]
    %v288 = vld [vmem:[#allocation10 + $0x10] sm:$0xff]
    %v289 = vld [vmem:[#allocation10 + $0x18] sm:$0xff]
    %v290 = vld [vmem:[#allocation11] sm:$0xff]
    %v291 = vld [vmem:[#allocation11 + $0x8] sm:$0xff]
    %v292 = vld [vmem:[#allocation11 + $0x10] sm:$0xff]
    %v293 = vld [vmem:[#allocation11 + $0x18] sm:$0xff]
    %v294 = vadd.f32 %v261, 0.0
    %v295 = vadd.f32 %v284, 0.0
    %v298 = vrot.slane %v294, 7
    %v299 = vrot.slane %v295, 6
    %vm300 = vcmask 1041409
    %v301 = vsel %vm300, %v299, %v298
    %vm302 = vcmask 261120
    %v303 = vsel %vm302, %v301, 0
    %305 = vmatpush.msra.mxu0 0.0
    %306 = vmatpush.msra.mxu0 0.0
    %307 = vmatpush.msra.mxu0 0.0
    %308 = vmatpush.msra.mxu0 0.0
    %309 = vmatpush.msra.mxu0 0.0
    %310 = vmatpush.msra.mxu0 0.0
    %311 = vmatpush.msra.mxu0 0.0
    %312 = vmatpush.msra.mxu0 0.0
    %313 = vmatpush.msra.mxu0 0.0
    %314 = vmatpush.msra.mxu0 0.0
    %315 = vmatpush.msra.mxu0 0.0
    %316 = vmatpush.msra.mxu0 0.0
    %317 = vmatpush.msra.mxu0 %v289
    %318 = vmatpush.msra.mxu0 %v288
    %319 = vmatpush.msra.mxu0 %v287
    %320 = vmatpush.msra.mxu0 %v286
    %321 = vmatmul.f32.gmra.mxu0 %v303
    %v322 = vpop.f32.mrf.mxu0
    %v323 = vadd.f32 0.0, %v322
    %324 = vdwg.mxu0
    %v326 = vrot.slane %v323, 1
    %v327 = vrot.slane %v323, 2
    %v330 = vadd.f32 %v179, %v326
    %v331 = vadd.f32 %v182, %v327
    %v332 = vxor.u32 %v330, 2147483648
    %v333 = vxor.u32 %v331, 2147483648
    %v334 = vmul.f32 %v332, 1.442695
    %v335 = vpow.pop %v334
    %v336 = vmul.f32 %v333, 1.442695
    %v337 = vpow.pop %v336
    %v338 = vadd.f32 %v335, 1.0
    %v339 = vadd.f32 %v337, 1.0
    %v340 = vrcp.pop %v338
    %v341 = vmul.f32 %v338, %v340
    %v342 = vsub.f32 1.0, %v341
    %v343 = vmul.f32 %v340, %v342
    %v344 = vadd.f32 %v340, %v343
    %vm345 = vweird.f32 %v338
    %vm346 = vweird.f32 %v340
    %vm347 = vmor %vm345, %vm346
    %v348 = vsel %vm347, %v340, %v344
    %v349 = vand.u32 2147483647, %v338
    %vm350 = vcmp.eq.f32.partialorder %v349, 8.507059e+37
    %v351 = vand.u32 %v338, 2147483648
    %v352 = vor.u32 1.1754944e-38, %v351
    %v353 = vsel %vm350, %v352, %v348
    %v354 = vmul.f32 1.0, %v353
    %v355 = vrcp.pop %v339
    %v356 = vmul.f32 %v339, %v355
    %v357 = vsub.f32 1.0, %v356
    %v358 = vmul.f32 %v355, %v357
    %v359 = vadd.f32 %v355, %v358
    %vm360 = vweird.f32 %v339
    %vm361 = vweird.f32 %v355
    %vm362 = vmor %vm360, %vm361
    %v363 = vsel %vm362, %v355, %v359
    %v364 = vand.u32 2147483647, %v339
    %vm365 = vcmp.eq.f32.partialorder %v364, 8.507059e+37
    %v366 = vand.u32 %v339, 2147483648
    %v367 = vor.u32 1.1754944e-38, %v366
    %v368 = vsel %vm365, %v367, %v363
    %v369 = vmul.f32 1.0, %v368
    %v370 = vmul.f32 %v354, %v294
    %v371 = vmul.f32 %v369, %v295
    %v374 = vrot.slane %v370, 7
    %v375 = vrot.slane %v371, 6
    %v376 = vsel %vm300, %v375, %v374
    %v377 = vsel %vm302, %v376, 0
    %379 = vmatpush.msra.mxu0 0.0
    %380 = vmatpush.msra.mxu0 0.0
    %381 = vmatpush.msra.mxu0 0.0
    %382 = vmatpush.msra.mxu0 0.0
    %383 = vmatpush.msra.mxu0 0.0
    %384 = vmatpush.msra.mxu0 0.0
    %385 = vmatpush.msra.mxu0 0.0
    %386 = vmatpush.msra.mxu0 0.0
    %387 = vmatpush.msra.mxu0 0.0
    %388 = vmatpush.msra.mxu0 0.0
    %389 = vmatpush.msra.mxu0 0.0
    %390 = vmatpush.msra.mxu0 0.0
    %391 = vmatpush.msra.mxu0 %v293
    %392 = vmatpush.msra.mxu0 %v292
    %393 = vmatpush.msra.mxu0 %v291
    %394 = vmatpush.msra.mxu0 %v290
    %395 = vmatmul.f32.gmra.mxu0 %v377
    %v396 = vpop.f32.mrf.mxu0
    %v397 = vadd.f32 0.0, %v396
    %398 = vdwg.mxu0
    %v400 = vrot.slane %v397, 1
    %v401 = vrot.slane %v397, 2
    %402 = vrot.lane.b32.xlu0 %v400, 64
    %v403 = vpop.permute.xlu0 %402
    %404 = vrot.lane.b32.xlu0 %v401, 64
    %v405 = vpop.permute.xlu0 %404
    %v408 = vadd.f32 %v179, %v403
    %v409 = vadd.f32 %v182, %v405
    %v410 = vtanh.pop %v408
    %v411 = vtanh.pop %v409
    %412 = vrot.lane.b32.xlu0 %v294, 32
    %v413 = vpop.permute.xlu0 %412
    %414 = vrot.lane.b32.xlu0 %v295, 32
    %v415 = vpop.permute.xlu0 %414
    %v418 = vmul.f32 %v354, %v413
    %v419 = vmul.f32 %v369, %v415
    %v420 = vsub.f32 1.0, %v354
    %v421 = vsub.f32 1.0, %v369
    %424 = vrot.lane.b32.xlu0 %v410, 96
    %v425 = vpop.permute.xlu0 %424
    %426 = vrot.lane.b32.xlu0 %v411, 96
    %v427 = vpop.permute.xlu0 %426
    %v430 = vmul.f32 %v420, %v425
    %v431 = vmul.f32 %v421, %v427
    %v432 = vadd.f32 %v418, %v430
    %v433 = vadd.f32 %v419, %v431
    %436 = vrot.lane.b32.xlu0 %v432, 96
    %v437 = vpop.permute.xlu0 %436
    %438 = vrot.lane.b32.xlu0 %v433, 96
    %v439 = vpop.permute.xlu0 %438
    %vm442 = vcmask 261127
    %443 = vst.msk [vmem:[#allocation13] sm:$0x80] %vm442, %v437
    %444 = vst.msk [vmem:[#allocation13 + $0x8] sm:$0x80] %vm442, %v439
    %446 = vset.pattern.permute.xlu0 7
    %447 = vperm.xlu0 %446, %v229
    %v448 = vpop.permute.xlu0 %447
    %451 = vset.pattern.permute.xlu0 7
    %452 = vperm.xlu0 %451, %v230
    %v453 = vpop.permute.xlu0 %452
    %v455 = vperm.slane %v432, 7
    %v456 = vperm.slane %v433, 7
    %v457 = vmul.f32 %v448, %v455
    %v458 = vmul.f32 %v453, %v456
    %v459 = vadd.f32 %v457, 0.0
    %v460 = vadd.f32 %v458, 0.0
    %463 = vrot.lane.b32.xlu0 %v459, 96
    %v464 = vpop.permute.xlu0 %463
    %465 = vrot.lane.b32.xlu0 %v460, 96
    %v466 = vpop.permute.xlu0 %465
    %v469 = vadd.f32 %v261, %v464
    %v470 = vadd.f32 %v284, %v466
    %v473 = vrot.slane %v469, 6
    %v474 = vrot.slane %v470, 5
    %v475 = vsel %vm300, %v474, %v473
    %v476 = vsel %vm302, %v475, 0
    %478 = vmatpush.msra.mxu0 0.0
    %479 = vmatpush.msra.mxu0 0.0
    %480 = vmatpush.msra.mxu0 0.0
    %481 = vmatpush.msra.mxu0 0.0
    %482 = vmatpush.msra.mxu0 0.0
    %483 = vmatpush.msra.mxu0 0.0
    %484 = vmatpush.msra.mxu0 0.0
    %485 = vmatpush.msra.mxu0 0.0
    %486 = vmatpush.msra.mxu0 0.0
    %487 = vmatpush.msra.mxu0 0.0
    %488 = vmatpush.msra.mxu0 0.0
    %489 = vmatpush.msra.mxu0 0.0
    %490 = vmatpush.msra.mxu0 %v289
    %491 = vmatpush.msra.mxu0 %v288
    %492 = vmatpush.msra.mxu0 %v287
    %493 = vmatpush.msra.mxu0 %v286
    %494 = vmatmul.f32.gmra.mxu0 %v476
    %v495 = vpop.f32.mrf.mxu0
    %v496 = vadd.f32 0.0, %v495
    %497 = vdwg.mxu0
    %v499 = vrot.slane %v496, 2
    %v500 = vrot.slane %v496, 3
    %v503 = vadd.f32 %v179, %v499
    %v504 = vadd.f32 %v182, %v500
    %v505 = vxor.u32 %v503, 2147483648
    %v506 = vxor.u32 %v504, 2147483648
    %v507 = vmul.f32 %v505, 1.442695
    %v508 = vpow.pop %v507
    %v509 = vmul.f32 %v506, 1.442695
    %v510 = vpow.pop %v509
    %v511 = vadd.f32 %v508, 1.0
    %v512 = vadd.f32 %v510, 1.0
    %v513 = vrcp.pop %v511
    %v514 = vmul.f32 %v511, %v513
    %v515 = vsub.f32 1.0, %v514
    %v516 = vmul.f32 %v513, %v515
    %v517 = vadd.f32 %v513, %v516
    %vm518 = vweird.f32 %v511
    %vm519 = vweird.f32 %v513
    %vm520 = vmor %vm518, %vm519
    %v521 = vsel %vm520, %v513, %v517
    %v522 = vand.u32 2147483647, %v511
    %vm523 = vcmp.eq.f32.partialorder %v522, 8.507059e+37
    %v524 = vand.u32 %v511, 2147483648
    %v525 = vor.u32 1.1754944e-38, %v524
    %v526 = vsel %vm523, %v525, %v521
    %v527 = vmul.f32 1.0, %v526
    %v528 = vrcp.pop %v512
    %v529 = vmul.f32 %v512, %v528
    %v530 = vsub.f32 1.0, %v529
    %v531 = vmul.f32 %v528, %v530
    %v532 = vadd.f32 %v528, %v531
    %vm533 = vweird.f32 %v512
    %vm534 = vweird.f32 %v528
    %vm535 = vmor %vm533, %vm534
    %v536 = vsel %vm535, %v528, %v532
    %v537 = vand.u32 2147483647, %v512
    %vm538 = vcmp.eq.f32.partialorder %v537, 8.507059e+37
    %v539 = vand.u32 %v512, 2147483648
    %v540 = vor.u32 1.1754944e-38, %v539
    %v541 = vsel %vm538, %v540, %v536
    %v542 = vmul.f32 1.0, %v541
    %v543 = vmul.f32 %v527, %v469
    %v544 = vmul.f32 %v542, %v470
    %v547 = vrot.slane %v543, 6
    %v548 = vrot.slane %v544, 5
    %v549 = vsel %vm300, %v548, %v547
    %v550 = vsel %vm302, %v549, 0
    %552 = vmatpush.msra.mxu0 0.0
    %553 = vmatpush.msra.mxu0 0.0
    %554 = vmatpush.msra.mxu0 0.0
    %555 = vmatpush.msra.mxu0 0.0
    %556 = vmatpush.msra.mxu0 0.0
    %557 = vmatpush.msra.mxu0 0.0
    %558 = vmatpush.msra.mxu0 0.0
    %559 = vmatpush.msra.mxu0 0.0
    %560 = vmatpush.msra.mxu0 0.0
    %561 = vmatpush.msra.mxu0 0.0
    %562 = vmatpush.msra.mxu0 0.0
    %563 = vmatpush.msra.mxu0 0.0
    %564 = vmatpush.msra.mxu0 %v293
    %565 = vmatpush.msra.mxu0 %v292
    %566 = vmatpush.msra.mxu0 %v291
    %567 = vmatpush.msra.mxu0 %v290
    %568 = vmatmul.f32.gmra.mxu0 %v550
    %v569 = vpop.f32.mrf.mxu0
    %v570 = vadd.f32 0.0, %v569
    %571 = vdwg.mxu0
    %v573 = vrot.slane %v570, 2
    %v574 = vrot.slane %v570, 3
    %575 = vrot.lane.b32.xlu0 %v573, 64
    %v576 = vpop.permute.xlu0 %575
    %577 = vrot.lane.b32.xlu0 %v574, 64
    %v578 = vpop.permute.xlu0 %577
    %v581 = vadd.f32 %v179, %v576
    %v582 = vadd.f32 %v182, %v578
    %v583 = vtanh.pop %v581
    %v584 = vtanh.pop %v582
    %585 = vrot.lane.b32.xlu0 %v469, 32
    %v586 = vpop.permute.xlu0 %585
    %587 = vrot.lane.b32.xlu0 %v470, 32
    %v588 = vpop.permute.xlu0 %587
    %v591 = vmul.f32 %v527, %v586
    %v592 = vmul.f32 %v542, %v588
    %v593 = vsub.f32 1.0, %v527
    %v594 = vsub.f32 1.0, %v542
    %597 = vrot.lane.b32.xlu0 %v583, 96
    %v598 = vpop.permute.xlu0 %597
    %599 = vrot.lane.b32.xlu0 %v584, 96
    %v600 = vpop.permute.xlu0 %599
    %v603 = vmul.f32 %v593, %v598
    %v604 = vmul.f32 %v594, %v600
    %v605 = vadd.f32 %v591, %v603
    %v606 = vadd.f32 %v592, %v604
    %609 = vrot.lane.b32.xlu0 %v605, 96
    %v610 = vpop.permute.xlu0 %609
    %611 = vrot.lane.b32.xlu0 %v606, 96
    %v612 = vpop.permute.xlu0 %611
    %vm615 = vcmask 260102
    %616 = vst.msk [vmem:[#allocation13] sm:$0x40] %vm615, %v610
    %617 = vst.msk [vmem:[#allocation13 + $0x8] sm:$0x40] %vm615, %v612
    %618 = vset.pattern.permute.xlu0 6
    %619 = vperm.xlu0 %618, %v229
    %v620 = vpop.permute.xlu0 %619
    %622 = vset.pattern.permute.xlu0 6
    %623 = vperm.xlu0 %622, %v230
    %v624 = vpop.permute.xlu0 %623
    %v626 = vperm.slane %v605, 6
    %v627 = vperm.slane %v606, 6
    %v628 = vmul.f32 %v620, %v626
    %v629 = vmul.f32 %v624, %v627
    %v630 = vadd.f32 %v459, %v628
    %v631 = vadd.f32 %v460, %v629
    %634 = vrot.lane.b32.xlu0 %v630, 96
    %v635 = vpop.permute.xlu0 %634
    %636 = vrot.lane.b32.xlu0 %v631, 96
    %v637 = vpop.permute.xlu0 %636
    %v640 = vadd.f32 %v261, %v635
    %v641 = vadd.f32 %v284, %v637
    %v644 = vrot.slane %v640, 5
    %v645 = vrot.slane %v641, 4
    %v646 = vsel %vm300, %v645, %v644
    %v647 = vsel %vm302, %v646, 0
    %649 = vmatpush.msra.mxu0 0.0
    %650 = vmatpush.msra.mxu0 0.0
    %651 = vmatpush.msra.mxu0 0.0
    %652 = vmatpush.msra.mxu0 0.0
    %653 = vmatpush.msra.mxu0 0.0
    %654 = vmatpush.msra.mxu0 0.0
    %655 = vmatpush.msra.mxu0 0.0
    %656 = vmatpush.msra.mxu0 0.0
    %657 = vmatpush.msra.mxu0 0.0
    %658 = vmatpush.msra.mxu0 0.0
    %659 = vmatpush.msra.mxu0 0.0
    %660 = vmatpush.msra.mxu0 0.0
    %661 = vmatpush.msra.mxu0 %v289
    %662 = vmatpush.msra.mxu0 %v288
    %663 = vmatpush.msra.mxu0 %v287
    %664 = vmatpush.msra.mxu0 %v286
    %665 = vmatmul.f32.gmra.mxu0 %v647
    %v666 = vpop.f32.mrf.mxu0
    %v667 = vadd.f32 0.0, %v666
    %668 = vdwg.mxu0
    %v670 = vrot.slane %v667, 3
    %v671 = vrot.slane %v667, 4
    %v674 = vadd.f32 %v179, %v670
    %v675 = vadd.f32 %v182, %v671
    %v676 = vxor.u32 %v674, 2147483648
    %v677 = vxor.u32 %v675, 2147483648
    %v678 = vmul.f32 %v676, 1.442695
    %v679 = vpow.pop %v678
    %v680 = vmul.f32 %v677, 1.442695
    %v681 = vpow.pop %v680
    %v682 = vadd.f32 %v679, 1.0
    %v683 = vadd.f32 %v681, 1.0
    %v684 = vrcp.pop %v682
    %v685 = vmul.f32 %v682, %v684
    %v686 = vsub.f32 1.0, %v685
    %v687 = vmul.f32 %v684, %v686
    %v688 = vadd.f32 %v684, %v687
    %vm689 = vweird.f32 %v682
    %vm690 = vweird.f32 %v684
    %vm691 = vmor %vm689, %vm690
    %v692 = vsel %vm691, %v684, %v688
    %v693 = vand.u32 2147483647, %v682
    %vm694 = vcmp.eq.f32.partialorder %v693, 8.507059e+37
    %v695 = vand.u32 %v682, 2147483648
    %v696 = vor.u32 1.1754944e-38, %v695
    %v697 = vsel %vm694, %v696, %v692
    %v698 = vmul.f32 1.0, %v697
    %v699 = vrcp.pop %v683
    %v700 = vmul.f32 %v683, %v699
    %v701 = vsub.f32 1.0, %v700
    %v702 = vmul.f32 %v699, %v701
    %v703 = vadd.f32 %v699, %v702
    %vm704 = vweird.f32 %v683
    %vm705 = vweird.f32 %v699
    %vm706 = vmor %vm704, %vm705
    %v707 = vsel %vm706, %v699, %v703
    %v708 = vand.u32 2147483647, %v683
    %vm709 = vcmp.eq.f32.partialorder %v708, 8.507059e+37
    %v710 = vand.u32 %v683, 2147483648
    %v711 = vor.u32 1.1754944e-38, %v710
    %v712 = vsel %vm709, %v711, %v707
    %v713 = vmul.f32 1.0, %v712
    %v714 = vmul.f32 %v698, %v640
    %v715 = vmul.f32 %v713, %v641
    %v718 = vrot.slane %v714, 5
    %v719 = vrot.slane %v715, 4
    %v720 = vsel %vm300, %v719, %v718
    %v721 = vsel %vm302, %v720, 0
    %723 = vmatpush.msra.mxu0 0.0
    %724 = vmatpush.msra.mxu0 0.0
    %725 = vmatpush.msra.mxu0 0.0
    %726 = vmatpush.msra.mxu0 0.0
    %727 = vmatpush.msra.mxu0 0.0
    %728 = vmatpush.msra.mxu0 0.0
    %729 = vmatpush.msra.mxu0 0.0
    %730 = vmatpush.msra.mxu0 0.0
    %731 = vmatpush.msra.mxu0 0.0
    %732 = vmatpush.msra.mxu0 0.0
    %733 = vmatpush.msra.mxu0 0.0
    %734 = vmatpush.msra.mxu0 0.0
    %735 = vmatpush.msra.mxu0 %v293
    %736 = vmatpush.msra.mxu0 %v292
    %737 = vmatpush.msra.mxu0 %v291
    %738 = vmatpush.msra.mxu0 %v290
    %739 = vmatmul.f32.gmra.mxu0 %v721
    %v740 = vpop.f32.mrf.mxu0
    %v741 = vadd.f32 0.0, %v740
    %742 = vdwg.mxu0
    %v744 = vrot.slane %v741, 3
    %v745 = vrot.slane %v741, 4
    %746 = vrot.lane.b32.xlu0 %v744, 64
    %v747 = vpop.permute.xlu0 %746
    %748 = vrot.lane.b32.xlu0 %v745, 64
    %v749 = vpop.permute.xlu0 %748
    %v752 = vadd.f32 %v179, %v747
    %v753 = vadd.f32 %v182, %v749
    %v754 = vtanh.pop %v752
    %v755 = vtanh.pop %v753
    %756 = vrot.lane.b32.xlu0 %v640, 32
    %v757 = vpop.permute.xlu0 %756
    %758 = vrot.lane.b32.xlu0 %v641, 32
    %v759 = vpop.permute.xlu0 %758
    %v762 = vmul.f32 %v698, %v757
    %v763 = vmul.f32 %v713, %v759
    %v764 = vsub.f32 1.0, %v698
    %v765 = vsub.f32 1.0, %v713
    %768 = vrot.lane.b32.xlu0 %v754, 96
    %v769 = vpop.permute.xlu0 %768
    %770 = vrot.lane.b32.xlu0 %v755, 96
    %v771 = vpop.permute.xlu0 %770
    %v774 = vmul.f32 %v764, %v769
    %v775 = vmul.f32 %v765, %v771
    %v776 = vadd.f32 %v762, %v774
    %v777 = vadd.f32 %v763, %v775
    %780 = vrot.lane.b32.xlu0 %v776, 96
    %v781 = vpop.permute.xlu0 %780
    %782 = vrot.lane.b32.xlu0 %v777, 96
    %v783 = vpop.permute.xlu0 %782
    %vm786 = vcmask 259077
    %787 = vst.msk [vmem:[#allocation13] sm:$0x20] %vm786, %v781
    %788 = vst.msk [vmem:[#allocation13 + $0x8] sm:$0x20] %vm786, %v783
    %789 = vset.pattern.permute.xlu0 5
    %790 = vperm.xlu0 %789, %v229
    %v791 = vpop.permute.xlu0 %790
    %793 = vset.pattern.permute.xlu0 5
    %794 = vperm.xlu0 %793, %v230
    %v795 = vpop.permute.xlu0 %794
    %v797 = vperm.slane %v776, 5
    %v798 = vperm.slane %v777, 5
    %v799 = vmul.f32 %v791, %v797
    %v800 = vmul.f32 %v795, %v798
    %v801 = vadd.f32 %v630, %v799
    %v802 = vadd.f32 %v631, %v800
    %805 = vrot.lane.b32.xlu0 %v801, 96
    %v806 = vpop.permute.xlu0 %805
    %807 = vrot.lane.b32.xlu0 %v802, 96
    %v808 = vpop.permute.xlu0 %807
    %v811 = vadd.f32 %v261, %v806
    %v812 = vadd.f32 %v284, %v808
    %v815 = vrot.slane %v811, 4
    %v816 = vrot.slane %v812, 3
    %v817 = vsel %vm300, %v816, %v815
    %v818 = vsel %vm302, %v817, 0
    %820 = vmatpush.msra.mxu0 0.0
    %821 = vmatpush.msra.mxu0 0.0
    %822 = vmatpush.msra.mxu0 0.0
    %823 = vmatpush.msra.mxu0 0.0
    %824 = vmatpush.msra.mxu0 0.0
    %825 = vmatpush.msra.mxu0 0.0
    %826 = vmatpush.msra.mxu0 0.0
    %827 = vmatpush.msra.mxu0 0.0
    %828 = vmatpush.msra.mxu0 0.0
    %829 = vmatpush.msra.mxu0 0.0
    %830 = vmatpush.msra.mxu0 0.0
    %831 = vmatpush.msra.mxu0 0.0
    %832 = vmatpush.msra.mxu0 %v289
    %833 = vmatpush.msra.mxu0 %v288
    %834 = vmatpush.msra.mxu0 %v287
    %835 = vmatpush.msra.mxu0 %v286
    %836 = vmatmul.f32.gmra.mxu0 %v818
    %v837 = vpop.f32.mrf.mxu0
    %v838 = vadd.f32 0.0, %v837
    %839 = vdwg.mxu0
    %v841 = vrot.slane %v838, 4
    %v842 = vrot.slane %v838, 5
    %v845 = vadd.f32 %v179, %v841
    %v846 = vadd.f32 %v182, %v842
    %v847 = vxor.u32 %v845, 2147483648
    %v848 = vxor.u32 %v846, 2147483648
    %v849 = vmul.f32 %v847, 1.442695
    %v850 = vpow.pop %v849
    %v851 = vmul.f32 %v848, 1.442695
    %v852 = vpow.pop %v851
    %v853 = vadd.f32 %v850, 1.0
    %v854 = vadd.f32 %v852, 1.0
    %v855 = vrcp.pop %v853
    %v856 = vmul.f32 %v853, %v855
    %v857 = vsub.f32 1.0, %v856
    %v858 = vmul.f32 %v855, %v857
    %v859 = vadd.f32 %v855, %v858
    %vm860 = vweird.f32 %v853
    %vm861 = vweird.f32 %v855
    %vm862 = vmor %vm860, %vm861
    %v863 = vsel %vm862, %v855, %v859
    %v864 = vand.u32 2147483647, %v853
    %vm865 = vcmp.eq.f32.partialorder %v864, 8.507059e+37
    %v866 = vand.u32 %v853, 2147483648
    %v867 = vor.u32 1.1754944e-38, %v866
    %v868 = vsel %vm865, %v867, %v863
    %v869 = vmul.f32 1.0, %v868
    %v870 = vrcp.pop %v854
    %v871 = vmul.f32 %v854, %v870
    %v872 = vsub.f32 1.0, %v871
    %v873 = vmul.f32 %v870, %v872
    %v874 = vadd.f32 %v870, %v873
    %vm875 = vweird.f32 %v854
    %vm876 = vweird.f32 %v870
    %vm877 = vmor %vm875, %vm876
    %v878 = vsel %vm877, %v870, %v874
    %v879 = vand.u32 2147483647, %v854
    %vm880 = vcmp.eq.f32.partialorder %v879, 8.507059e+37
    %v881 = vand.u32 %v854, 2147483648
    %v882 = vor.u32 1.1754944e-38, %v881
    %v883 = vsel %vm880, %v882, %v878
    %v884 = vmul.f32 1.0, %v883
    %v885 = vmul.f32 %v869, %v811
    %v886 = vmul.f32 %v884, %v812
    %v889 = vrot.slane %v885, 4
    %v890 = vrot.slane %v886, 3
    %v891 = vsel %vm300, %v890, %v889
    %v892 = vsel %vm302, %v891, 0
    %894 = vmatpush.msra.mxu0 0.0
    %895 = vmatpush.msra.mxu0 0.0
    %896 = vmatpush.msra.mxu0 0.0
    %897 = vmatpush.msra.mxu0 0.0
    %898 = vmatpush.msra.mxu0 0.0
    %899 = vmatpush.msra.mxu0 0.0
    %900 = vmatpush.msra.mxu0 0.0
    %901 = vmatpush.msra.mxu0 0.0
    %902 = vmatpush.msra.mxu0 0.0
    %903 = vmatpush.msra.mxu0 0.0
    %904 = vmatpush.msra.mxu0 0.0
    %905 = vmatpush.msra.mxu0 0.0
    %906 = vmatpush.msra.mxu0 %v293
    %907 = vmatpush.msra.mxu0 %v292
    %908 = vmatpush.msra.mxu0 %v291
    %909 = vmatpush.msra.mxu0 %v290
    %910 = vmatmul.f32.gmra.mxu0 %v892
    %v911 = vpop.f32.mrf.mxu0
    %v912 = vadd.f32 0.0, %v911
    %913 = vdwg.mxu0
    %v915 = vrot.slane %v912, 4
    %v916 = vrot.slane %v912, 5
    %917 = vrot.lane.b32.xlu0 %v915, 64
    %v918 = vpop.permute.xlu0 %917
    %919 = vrot.lane.b32.xlu0 %v916, 64
    %v920 = vpop.permute.xlu0 %919
    %v923 = vadd.f32 %v179, %v918
    %v924 = vadd.f32 %v182, %v920
    %v925 = vtanh.pop %v923
    %v926 = vtanh.pop %v924
    %927 = vrot.lane.b32.xlu0 %v811, 32
    %v928 = vpop.permute.xlu0 %927
    %929 = vrot.lane.b32.xlu0 %v812, 32
    %v930 = vpop.permute.xlu0 %929
    %v933 = vmul.f32 %v869, %v928
    %v934 = vmul.f32 %v884, %v930
    %v935 = vsub.f32 1.0, %v869
    %v936 = vsub.f32 1.0, %v884
    %939 = vrot.lane.b32.xlu0 %v925, 96
    %v940 = vpop.permute.xlu0 %939
    %941 = vrot.lane.b32.xlu0 %v926, 96
    %v942 = vpop.permute.xlu0 %941
    %v945 = vmul.f32 %v935, %v940
    %v946 = vmul.f32 %v936, %v942
    %v947 = vadd.f32 %v933, %v945
    %v948 = vadd.f32 %v934, %v946
    %951 = vrot.lane.b32.xlu0 %v947, 96
    %v952 = vpop.permute.xlu0 %951
    %953 = vrot.lane.b32.xlu0 %v948, 96
    %v954 = vpop.permute.xlu0 %953
    %vm957 = vcmask 258052
    %958 = vst.msk [vmem:[#allocation13] sm:$0x10] %vm957, %v952
    %959 = vst.msk [vmem:[#allocation13 + $0x8] sm:$0x10] %vm957, %v954
    %960 = vset.pattern.permute.xlu0 4
    %961 = vperm.xlu0 %960, %v229
    %v962 = vpop.permute.xlu0 %961
    %964 = vset.pattern.permute.xlu0 4
    %965 = vperm.xlu0 %964, %v230
    %v966 = vpop.permute.xlu0 %965
    %v968 = vperm.slane %v947, 4
    %v969 = vperm.slane %v948, 4
    %v970 = vmul.f32 %v962, %v968
    %v971 = vmul.f32 %v966, %v969
    %v972 = vadd.f32 %v801, %v970
    %v973 = vadd.f32 %v802, %v971
    %976 = vrot.lane.b32.xlu0 %v972, 96
    %v977 = vpop.permute.xlu0 %976
    %978 = vrot.lane.b32.xlu0 %v973, 96
    %v979 = vpop.permute.xlu0 %978
    %v982 = vadd.f32 %v261, %v977
    %v983 = vadd.f32 %v284, %v979
    %v986 = vrot.slane %v982, 3
    %v987 = vrot.slane %v983, 2
    %v988 = vsel %vm300, %v987, %v986
    %v989 = vsel %vm302, %v988, 0
    %991 = vmatpush.msra.mxu0 0.0
    %992 = vmatpush.msra.mxu0 0.0
    %993 = vmatpush.msra.mxu0 0.0
    %994 = vmatpush.msra.mxu0 0.0
    %995 = vmatpush.msra.mxu0 0.0
    %996 = vmatpush.msra.mxu0 0.0
    %997 = vmatpush.msra.mxu0 0.0
    %998 = vmatpush.msra.mxu0 0.0
    %999 = vmatpush.msra.mxu0 0.0
    %1000 = vmatpush.msra.mxu0 0.0
    %1001 = vmatpush.msra.mxu0 0.0
    %1002 = vmatpush.msra.mxu0 0.0
    %1003 = vmatpush.msra.mxu0 %v289
    %1004 = vmatpush.msra.mxu0 %v288
    %1005 = vmatpush.msra.mxu0 %v287
    %1006 = vmatpush.msra.mxu0 %v286
    %1007 = vmatmul.f32.gmra.mxu0 %v989
    %v1008 = vpop.f32.mrf.mxu0
    %v1009 = vadd.f32 0.0, %v1008
    %1010 = vdwg.mxu0
    %v1012 = vrot.slane %v1009, 5
    %v1013 = vrot.slane %v1009, 6
    %v1016 = vadd.f32 %v179, %v1012
    %v1017 = vadd.f32 %v182, %v1013
    %v1018 = vxor.u32 %v1016, 2147483648
    %v1019 = vxor.u32 %v1017, 2147483648
    %v1020 = vmul.f32 %v1018, 1.442695
    %v1021 = vpow.pop %v1020
    %v1022 = vmul.f32 %v1019, 1.442695
    %v1023 = vpow.pop %v1022
    %v1024 = vadd.f32 %v1021, 1.0
    %v1025 = vadd.f32 %v1023, 1.0
    %v1026 = vrcp.pop %v1024
    %v1027 = vmul.f32 %v1024, %v1026
    %v1028 = vsub.f32 1.0, %v1027
    %v1029 = vmul.f32 %v1026, %v1028
    %v1030 = vadd.f32 %v1026, %v1029
    %vm1031 = vweird.f32 %v1024
    %vm1032 = vweird.f32 %v1026
    %vm1033 = vmor %vm1031, %vm1032
    %v1034 = vsel %vm1033, %v1026, %v1030
    %v1035 = vand.u32 2147483647, %v1024
    %vm1036 = vcmp.eq.f32.partialorder %v1035, 8.507059e+37
    %v1037 = vand.u32 %v1024, 2147483648
    %v1038 = vor.u32 1.1754944e-38, %v1037
    %v1039 = vsel %vm1036, %v1038, %v1034
    %v1040 = vmul.f32 1.0, %v1039
    %v1041 = vrcp.pop %v1025
    %v1042 = vmul.f32 %v1025, %v1041
    %v1043 = vsub.f32 1.0, %v1042
    %v1044 = vmul.f32 %v1041, %v1043
    %v1045 = vadd.f32 %v1041, %v1044
    %vm1046 = vweird.f32 %v1025
    %vm1047 = vweird.f32 %v1041
    %vm1048 = vmor %vm1046, %vm1047
    %v1049 = vsel %vm1048, %v1041, %v1045
    %v1050 = vand.u32 2147483647, %v1025
    %vm1051 = vcmp.eq.f32.partialorder %v1050, 8.507059e+37
    %v1052 = vand.u32 %v1025, 2147483648
    %v1053 = vor.u32 1.1754944e-38, %v1052
    %v1054 = vsel %vm1051, %v1053, %v1049
    %v1055 = vmul.f32 1.0, %v1054
    %v1056 = vmul.f32 %v1040, %v982
    %v1057 = vmul.f32 %v1055, %v983
    %v1060 = vrot.slane %v1056, 3
    %v1061 = vrot.slane %v1057, 2
    %v1062 = vsel %vm300, %v1061, %v1060
    %v1063 = vsel %vm302, %v1062, 0
    %1065 = vmatpush.msra.mxu0 0.0
    %1066 = vmatpush.msra.mxu0 0.0
    %1067 = vmatpush.msra.mxu0 0.0
    %1068 = vmatpush.msra.mxu0 0.0
    %1069 = vmatpush.msra.mxu0 0.0
    %1070 = vmatpush.msra.mxu0 0.0
    %1071 = vmatpush.msra.mxu0 0.0
    %1072 = vmatpush.msra.mxu0 0.0
    %1073 = vmatpush.msra.mxu0 0.0
    %1074 = vmatpush.msra.mxu0 0.0
    %1075 = vmatpush.msra.mxu0 0.0
    %1076 = vmatpush.msra.mxu0 0.0
    %1077 = vmatpush.msra.mxu0 %v293
    %1078 = vmatpush.msra.mxu0 %v292
    %1079 = vmatpush.msra.mxu0 %v291
    %1080 = vmatpush.msra.mxu0 %v290
    %1081 = vmatmul.f32.gmra.mxu0 %v1063
    %v1082 = vpop.f32.mrf.mxu0
    %v1083 = vadd.f32 0.0, %v1082
    %1084 = vdwg.mxu0
    %v1086 = vrot.slane %v1083, 5
    %v1087 = vrot.slane %v1083, 6
    %1088 = vrot.lane.b32.xlu0 %v1086, 64
    %v1089 = vpop.permute.xlu0 %1088
    %1090 = vrot.lane.b32.xlu0 %v1087, 64
    %v1091 = vpop.permute.xlu0 %1090
    %v1094 = vadd.f32 %v179, %v1089
    %v1095 = vadd.f32 %v182, %v1091
    %v1096 = vtanh.pop %v1094
    %v1097 = vtanh.pop %v1095
    %1098 = vrot.lane.b32.xlu0 %v982, 32
    %v1099 = vpop.permute.xlu0 %1098
    %1100 = vrot.lane.b32.xlu0 %v983, 32
    %v1101 = vpop.permute.xlu0 %1100
    %v1104 = vmul.f32 %v1040, %v1099
    %v1105 = vmul.f32 %v1055, %v1101
    %v1106 = vsub.f32 1.0, %v1040
    %v1107 = vsub.f32 1.0, %v1055
    %1110 = vrot.lane.b32.xlu0 %v1096, 96
    %v1111 = vpop.permute.xlu0 %1110
    %1112 = vrot.lane.b32.xlu0 %v1097, 96
    %v1113 = vpop.permute.xlu0 %1112
    %v1116 = vmul.f32 %v1106, %v1111
    %v1117 = vmul.f32 %v1107, %v1113
    %v1118 = vadd.f32 %v1104, %v1116
    %v1119 = vadd.f32 %v1105, %v1117
    %1122 = vrot.lane.b32.xlu0 %v1118, 96
    %v1123 = vpop.permute.xlu0 %1122
    %1124 = vrot.lane.b32.xlu0 %v1119, 96
    %v1125 = vpop.permute.xlu0 %1124
    %vm1128 = vcmask 257027
    %1129 = vst.msk [vmem:[#allocation13] sm:$0x8] %vm1128, %v1123
    %1130 = vst.msk [vmem:[#allocation13 + $0x8] sm:$0x8] %vm1128, %v1125
    %1131 = vset.pattern.permute.xlu0 3
    %1132 = vperm.xlu0 %1131, %v229
    %v1133 = vpop.permute.xlu0 %1132
    %1135 = vset.pattern.permute.xlu0 3
    %1136 = vperm.xlu0 %1135, %v230
    %v1137 = vpop.permute.xlu0 %1136
    %v1139 = vperm.slane %v1118, 3
    %v1140 = vperm.slane %v1119, 3
    %v1141 = vmul.f32 %v1133, %v1139
    %v1142 = vmul.f32 %v1137, %v1140
    %v1143 = vadd.f32 %v972, %v1141
    %v1144 = vadd.f32 %v973, %v1142
    %1147 = vrot.lane.b32.xlu0 %v1143, 96
    %v1148 = vpop.permute.xlu0 %1147
    %1149 = vrot.lane.b32.xlu0 %v1144, 96
    %v1150 = vpop.permute.xlu0 %1149
    %v1153 = vadd.f32 %v261, %v1148
    %v1154 = vadd.f32 %v284, %v1150
    %v1157 = vrot.slane %v1153, 2
    %v1158 = vrot.slane %v1154, 1
    %v1159 = vsel %vm300, %v1158, %v1157
    %v1160 = vsel %vm302, %v1159, 0
    %1162 = vmatpush.msra.mxu0 0.0
    %1163 = vmatpush.msra.mxu0 0.0
    %1164 = vmatpush.msra.mxu0 0.0
    %1165 = vmatpush.msra.mxu0 0.0
    %1166 = vmatpush.msra.mxu0 0.0
    %1167 = vmatpush.msra.mxu0 0.0
    %1168 = vmatpush.msra.mxu0 0.0
    %1169 = vmatpush.msra.mxu0 0.0
    %1170 = vmatpush.msra.mxu0 0.0
    %1171 = vmatpush.msra.mxu0 0.0
    %1172 = vmatpush.msra.mxu0 0.0
    %1173 = vmatpush.msra.mxu0 0.0
    %1174 = vmatpush.msra.mxu0 %v289
    %1175 = vmatpush.msra.mxu0 %v288
    %1176 = vmatpush.msra.mxu0 %v287
    %1177 = vmatpush.msra.mxu0 %v286
    %1178 = vmatmul.f32.gmra.mxu0 %v1160
    %v1179 = vpop.f32.mrf.mxu0
    %v1180 = vadd.f32 0.0, %v1179
    %1181 = vdwg.mxu0
    %v1183 = vrot.slane %v1180, 6
    %v1184 = vrot.slane %v1180, 7
    %v1187 = vadd.f32 %v179, %v1183
    %v1188 = vadd.f32 %v182, %v1184
    %v1189 = vxor.u32 %v1187, 2147483648
    %v1190 = vxor.u32 %v1188, 2147483648
    %v1191 = vmul.f32 %v1189, 1.442695
    %v1192 = vpow.pop %v1191
    %v1193 = vmul.f32 %v1190, 1.442695
    %v1194 = vpow.pop %v1193
    %v1195 = vadd.f32 %v1192, 1.0
    %v1196 = vadd.f32 %v1194, 1.0
    %v1197 = vrcp.pop %v1195
    %v1198 = vmul.f32 %v1195, %v1197
    %v1199 = vsub.f32 1.0, %v1198
    %v1200 = vmul.f32 %v1197, %v1199
    %v1201 = vadd.f32 %v1197, %v1200
    %vm1202 = vweird.f32 %v1195
    %vm1203 = vweird.f32 %v1197
    %vm1204 = vmor %vm1202, %vm1203
    %v1205 = vsel %vm1204, %v1197, %v1201
    %v1206 = vand.u32 2147483647, %v1195
    %vm1207 = vcmp.eq.f32.partialorder %v1206, 8.507059e+37
    %v1208 = vand.u32 %v1195, 2147483648
    %v1209 = vor.u32 1.1754944e-38, %v1208
    %v1210 = vsel %vm1207, %v1209, %v1205
    %v1211 = vmul.f32 1.0, %v1210
    %v1212 = vrcp.pop %v1196
    %v1213 = vmul.f32 %v1196, %v1212
    %v1214 = vsub.f32 1.0, %v1213
    %v1215 = vmul.f32 %v1212, %v1214
    %v1216 = vadd.f32 %v1212, %v1215
    %vm1217 = vweird.f32 %v1196
    %vm1218 = vweird.f32 %v1212
    %vm1219 = vmor %vm1217, %vm1218
    %v1220 = vsel %vm1219, %v1212, %v1216
    %v1221 = vand.u32 2147483647, %v1196
    %vm1222 = vcmp.eq.f32.partialorder %v1221, 8.507059e+37
    %v1223 = vand.u32 %v1196, 2147483648
    %v1224 = vor.u32 1.1754944e-38, %v1223
    %v1225 = vsel %vm1222, %v1224, %v1220
    %v1226 = vmul.f32 1.0, %v1225
    %v1227 = vmul.f32 %v1211, %v1153
    %v1228 = vmul.f32 %v1226, %v1154
    %v1231 = vrot.slane %v1227, 2
    %v1232 = vrot.slane %v1228, 1
    %v1233 = vsel %vm300, %v1232, %v1231
    %v1234 = vsel %vm302, %v1233, 0
    %1236 = vmatpush.msra.mxu0 0.0
    %1237 = vmatpush.msra.mxu0 0.0
    %1238 = vmatpush.msra.mxu0 0.0
    %1239 = vmatpush.msra.mxu0 0.0
    %1240 = vmatpush.msra.mxu0 0.0
    %1241 = vmatpush.msra.mxu0 0.0
    %1242 = vmatpush.msra.mxu0 0.0
    %1243 = vmatpush.msra.mxu0 0.0
    %1244 = vmatpush.msra.mxu0 0.0
    %1245 = vmatpush.msra.mxu0 0.0
    %1246 = vmatpush.msra.mxu0 0.0
    %1247 = vmatpush.msra.mxu0 0.0
    %1248 = vmatpush.msra.mxu0 %v293
    %1249 = vmatpush.msra.mxu0 %v292
    %1250 = vmatpush.msra.mxu0 %v291
    %1251 = vmatpush.msra.mxu0 %v290
    %1252 = vmatmul.f32.gmra.mxu0 %v1234
    %v1253 = vpop.f32.mrf.mxu0
    %v1254 = vadd.f32 0.0, %v1253
    %1255 = vdwg.mxu0
    %v1257 = vrot.slane %v1254, 6
    %v1258 = vrot.slane %v1254, 7
    %1259 = vrot.lane.b32.xlu0 %v1257, 64
    %v1260 = vpop.permute.xlu0 %1259
    %1261 = vrot.lane.b32.xlu0 %v1258, 64
    %v1262 = vpop.permute.xlu0 %1261
    %v1265 = vadd.f32 %v179, %v1260
    %v1266 = vadd.f32 %v182, %v1262
    %v1267 = vtanh.pop %v1265
    %v1268 = vtanh.pop %v1266
    %1269 = vrot.lane.b32.xlu0 %v1153, 32
    %v1270 = vpop.permute.xlu0 %1269
    %1271 = vrot.lane.b32.xlu0 %v1154, 32
    %v1272 = vpop.permute.xlu0 %1271
    %v1275 = vmul.f32 %v1211, %v1270
    %v1276 = vmul.f32 %v1226, %v1272
    %v1277 = vsub.f32 1.0, %v1211
    %v1278 = vsub.f32 1.0, %v1226
    %1281 = vrot.lane.b32.xlu0 %v1267, 96
    %v1282 = vpop.permute.xlu0 %1281
    %1283 = vrot.lane.b32.xlu0 %v1268, 96
    %v1284 = vpop.permute.xlu0 %1283
    %v1287 = vmul.f32 %v1277, %v1282
    %v1288 = vmul.f32 %v1278, %v1284
    %v1289 = vadd.f32 %v1275, %v1287
    %v1290 = vadd.f32 %v1276, %v1288
    %1293 = vrot.lane.b32.xlu0 %v1289, 96
    %v1294 = vpop.permute.xlu0 %1293
    %1295 = vrot.lane.b32.xlu0 %v1290, 96
    %v1296 = vpop.permute.xlu0 %1295
    %vm1299 = vcmask 256002
    %1300 = vst.msk [vmem:[#allocation13] sm:$0x4] %vm1299, %v1294
    %1301 = vst.msk [vmem:[#allocation13 + $0x8] sm:$0x4] %vm1299, %v1296
    %1302 = vset.pattern.permute.xlu0 2
    %1303 = vperm.xlu0 %1302, %v229
    %v1304 = vpop.permute.xlu0 %1303
    %1306 = vset.pattern.permute.xlu0 2
    %1307 = vperm.xlu0 %1306, %v230
    %v1308 = vpop.permute.xlu0 %1307
    %v1310 = vperm.slane %v1289, 2
    %v1311 = vperm.slane %v1290, 2
    %v1312 = vmul.f32 %v1304, %v1310
    %v1313 = vmul.f32 %v1308, %v1311
    %v1314 = vadd.f32 %v1143, %v1312
    %v1315 = vadd.f32 %v1144, %v1313
    %1318 = vrot.lane.b32.xlu0 %v1314, 96
    %v1319 = vpop.permute.xlu0 %1318
    %1320 = vrot.lane.b32.xlu0 %v1315, 96
    %v1321 = vpop.permute.xlu0 %1320
    %v1324 = vadd.f32 %v261, %v1319
    %v1325 = vadd.f32 %v284, %v1321
    %v1328 = vrot.slane %v1324, 1
    %v1329 = vsel %vm300, %v1325, %v1328
    %v1330 = vsel %vm302, %v1329, 0
    %1332 = vmatpush.msra.mxu0 0.0
    %1333 = vmatpush.msra.mxu0 0.0
    %1334 = vmatpush.msra.mxu0 0.0
    %1335 = vmatpush.msra.mxu0 0.0
    %1336 = vmatpush.msra.mxu0 0.0
    %1337 = vmatpush.msra.mxu0 0.0
    %1338 = vmatpush.msra.mxu0 0.0
    %1339 = vmatpush.msra.mxu0 0.0
    %1340 = vmatpush.msra.mxu0 0.0
    %1341 = vmatpush.msra.mxu0 0.0
    %1342 = vmatpush.msra.mxu0 0.0
    %1343 = vmatpush.msra.mxu0 0.0
    %1344 = vmatpush.msra.mxu0 %v289
    %1345 = vmatpush.msra.mxu0 %v288
    %1346 = vmatpush.msra.mxu0 %v287
    %1347 = vmatpush.msra.mxu0 %v286
    %1348 = vmatmul.f32.gmra.mxu0 %v1330
    %v1349 = vpop.f32.mrf.mxu0
    %v1350 = vadd.f32 0.0, %v1349
    %1351 = vdwg.mxu0
    %v1353 = vrot.slane %v1350, 7
    %v1356 = vadd.f32 %v179, %v1353
    %v1357 = vadd.f32 %v182, %v1350
    %v1358 = vxor.u32 %v1356, 2147483648
    %v1359 = vxor.u32 %v1357, 2147483648
    %v1360 = vmul.f32 %v1358, 1.442695
    %v1361 = vpow.pop %v1360
    %v1362 = vmul.f32 %v1359, 1.442695
    %v1363 = vpow.pop %v1362
    %v1364 = vadd.f32 %v1361, 1.0
    %v1365 = vadd.f32 %v1363, 1.0
    %v1366 = vrcp.pop %v1364
    %v1367 = vmul.f32 %v1364, %v1366
    %v1368 = vsub.f32 1.0, %v1367
    %v1369 = vmul.f32 %v1366, %v1368
    %v1370 = vadd.f32 %v1366, %v1369
    %vm1371 = vweird.f32 %v1364
    %vm1372 = vweird.f32 %v1366
    %vm1373 = vmor %vm1371, %vm1372
    %v1374 = vsel %vm1373, %v1366, %v1370
    %v1375 = vand.u32 2147483647, %v1364
    %vm1376 = vcmp.eq.f32.partialorder %v1375, 8.507059e+37
    %v1377 = vand.u32 %v1364, 2147483648
    %v1378 = vor.u32 1.1754944e-38, %v1377
    %v1379 = vsel %vm1376, %v1378, %v1374
    %v1380 = vmul.f32 1.0, %v1379
    %v1381 = vrcp.pop %v1365
    %v1382 = vmul.f32 %v1365, %v1381
    %v1383 = vsub.f32 1.0, %v1382
    %v1384 = vmul.f32 %v1381, %v1383
    %v1385 = vadd.f32 %v1381, %v1384
    %vm1386 = vweird.f32 %v1365
    %vm1387 = vweird.f32 %v1381
    %vm1388 = vmor %vm1386, %vm1387
    %v1389 = vsel %vm1388, %v1381, %v1385
    %v1390 = vand.u32 2147483647, %v1365
    %vm1391 = vcmp.eq.f32.partialorder %v1390, 8.507059e+37
    %v1392 = vand.u32 %v1365, 2147483648
    %v1393 = vor.u32 1.1754944e-38, %v1392
    %v1394 = vsel %vm1391, %v1393, %v1389
    %v1395 = vmul.f32 1.0, %v1394
    %v1396 = vmul.f32 %v1380, %v1324
    %v1397 = vmul.f32 %v1395, %v1325
    %v1400 = vrot.slane %v1396, 1
    %v1401 = vsel %vm300, %v1397, %v1400
    %v1402 = vsel %vm302, %v1401, 0
    %1404 = vmatpush.msra.mxu0 0.0
    %1405 = vmatpush.msra.mxu0 0.0
    %1406 = vmatpush.msra.mxu0 0.0
    %1407 = vmatpush.msra.mxu0 0.0
    %1408 = vmatpush.msra.mxu0 0.0
    %1409 = vmatpush.msra.mxu0 0.0
    %1410 = vmatpush.msra.mxu0 0.0
    %1411 = vmatpush.msra.mxu0 0.0
    %1412 = vmatpush.msra.mxu0 0.0
    %1413 = vmatpush.msra.mxu0 0.0
    %1414 = vmatpush.msra.mxu0 0.0
    %1415 = vmatpush.msra.mxu0 0.0
    %1416 = vmatpush.msra.mxu0 %v293
    %1417 = vmatpush.msra.mxu0 %v292
    %1418 = vmatpush.msra.mxu0 %v291
    %1419 = vmatpush.msra.mxu0 %v290
    %1420 = vmatmul.f32.gmra.mxu0 %v1402
    %v1421 = vpop.f32.mrf.mxu0
    %v1422 = vadd.f32 0.0, %v1421
    %1423 = vdwg.mxu0
    %v1425 = vrot.slane %v1422, 7
    %1426 = vrot.lane.b32.xlu0 %v1425, 64
    %v1427 = vpop.permute.xlu0 %1426
    %1428 = vrot.lane.b32.xlu0 %v1422, 64
    %v1429 = vpop.permute.xlu0 %1428
    %v1432 = vadd.f32 %v179, %v1427
    %v1433 = vadd.f32 %v182, %v1429
    %v1434 = vtanh.pop %v1432
    %v1435 = vtanh.pop %v1433
    %1436 = vrot.lane.b32.xlu0 %v1324, 32
    %v1437 = vpop.permute.xlu0 %1436
    %1438 = vrot.lane.b32.xlu0 %v1325, 32
    %v1439 = vpop.permute.xlu0 %1438
    %v1442 = vmul.f32 %v1380, %v1437
    %v1443 = vmul.f32 %v1395, %v1439
    %v1444 = vsub.f32 1.0, %v1380
    %v1445 = vsub.f32 1.0, %v1395
    %1448 = vrot.lane.b32.xlu0 %v1434, 96
    %v1449 = vpop.permute.xlu0 %1448
    %1450 = vrot.lane.b32.xlu0 %v1435, 96
    %v1451 = vpop.permute.xlu0 %1450
    %v1454 = vmul.f32 %v1444, %v1449
    %v1455 = vmul.f32 %v1445, %v1451
    %v1456 = vadd.f32 %v1442, %v1454
    %v1457 = vadd.f32 %v1443, %v1455
    %1460 = vrot.lane.b32.xlu0 %v1456, 96
    %v1461 = vpop.permute.xlu0 %1460
    %1462 = vrot.lane.b32.xlu0 %v1457, 96
    %v1463 = vpop.permute.xlu0 %1462
    %vm1466 = vcmask 254977
    %1467 = vst.msk [vmem:[#allocation13] sm:$0x2] %vm1466, %v1461
    %1468 = vst.msk [vmem:[#allocation13 + $0x8] sm:$0x2] %vm1466, %v1463
    %1469 = vset.pattern.permute.xlu0 1
    %1470 = vperm.xlu0 %1469, %v229
    %v1471 = vpop.permute.xlu0 %1470
    %1473 = vset.pattern.permute.xlu0 1
    %1474 = vperm.xlu0 %1473, %v230
    %v1475 = vpop.permute.xlu0 %1474
    %v1477 = vperm.slane %v1456, 1
    %v1478 = vperm.slane %v1457, 1
    %v1479 = vmul.f32 %v1471, %v1477
    %v1480 = vmul.f32 %v1475, %v1478
    %v1481 = vadd.f32 %v1314, %v1479
    %v1482 = vadd.f32 %v1315, %v1480
    %1485 = vrot.lane.b32.xlu0 %v1481, 96
    %v1486 = vpop.permute.xlu0 %1485
    %1487 = vrot.lane.b32.xlu0 %v1482, 96
    %v1488 = vpop.permute.xlu0 %1487
    %v1491 = vadd.f32 %v261, %v1486
    %v1492 = vadd.f32 %v284, %v1488
    %v1495 = vrot.slane %v1492, 7
    %v1496 = vsel %vm300, %v1495, %v1491
    %v1497 = vsel %vm302, %v1496, 0
    %1499 = vmatpush.msra.mxu0 0.0
    %1500 = vmatpush.msra.mxu0 0.0
    %1501 = vmatpush.msra.mxu0 0.0
    %1502 = vmatpush.msra.mxu0 0.0
    %1503 = vmatpush.msra.mxu0 0.0
    %1504 = vmatpush.msra.mxu0 0.0
    %1505 = vmatpush.msra.mxu0 0.0
    %1506 = vmatpush.msra.mxu0 0.0
    %1507 = vmatpush.msra.mxu0 0.0
    %1508 = vmatpush.msra.mxu0 0.0
    %1509 = vmatpush.msra.mxu0 0.0
    %1510 = vmatpush.msra.mxu0 0.0
    %1511 = vmatpush.msra.mxu0 %v289
    %1512 = vmatpush.msra.mxu0 %v288
    %1513 = vmatpush.msra.mxu0 %v287
    %1514 = vmatpush.msra.mxu0 %v286
    %1515 = vmatmul.f32.gmra.mxu0 %v1497
    %v1516 = vpop.f32.mrf.mxu0
    %v1517 = vadd.f32 0.0, %v1516
    %1518 = vdwg.mxu0
    %v1520 = vrot.slane %v1517, 1
    %v1523 = vadd.f32 %v179, %v1517
    %v1524 = vadd.f32 %v182, %v1520
    %v1525 = vxor.u32 %v1523, 2147483648
    %v1526 = vxor.u32 %v1524, 2147483648
    %v1527 = vmul.f32 %v1525, 1.442695
    %v1528 = vpow.pop %v1527
    %v1529 = vmul.f32 %v1526, 1.442695
    %v1530 = vpow.pop %v1529
    %v1531 = vadd.f32 %v1528, 1.0
    %v1532 = vadd.f32 %v1530, 1.0
    %v1533 = vrcp.pop %v1531
    %v1534 = vmul.f32 %v1531, %v1533
    %v1535 = vsub.f32 1.0, %v1534
    %v1536 = vmul.f32 %v1533, %v1535
    %v1537 = vadd.f32 %v1533, %v1536
    %vm1538 = vweird.f32 %v1531
    %vm1539 = vweird.f32 %v1533
    %vm1540 = vmor %vm1538, %vm1539
    %v1541 = vsel %vm1540, %v1533, %v1537
    %v1542 = vand.u32 2147483647, %v1531
    %vm1543 = vcmp.eq.f32.partialorder %v1542, 8.507059e+37
    %v1544 = vand.u32 %v1531, 2147483648
    %v1545 = vor.u32 1.1754944e-38, %v1544
    %v1546 = vsel %vm1543, %v1545, %v1541
    %v1547 = vmul.f32 1.0, %v1546
    %v1548 = vrcp.pop %v1532
    %v1549 = vmul.f32 %v1532, %v1548
    %v1550 = vsub.f32 1.0, %v1549
    %v1551 = vmul.f32 %v1548, %v1550
    %v1552 = vadd.f32 %v1548, %v1551
    %vm1553 = vweird.f32 %v1532
    %vm1554 = vweird.f32 %v1548
    %vm1555 = vmor %vm1553, %vm1554
    %v1556 = vsel %vm1555, %v1548, %v1552
    %v1557 = vand.u32 2147483647, %v1532
    %vm1558 = vcmp.eq.f32.partialorder %v1557, 8.507059e+37
    %v1559 = vand.u32 %v1532, 2147483648
    %v1560 = vor.u32 1.1754944e-38, %v1559
    %v1561 = vsel %vm1558, %v1560, %v1556
    %v1562 = vmul.f32 1.0, %v1561
    %v1563 = vmul.f32 %v1547, %v1491
    %v1564 = vmul.f32 %v1562, %v1492
    %v1567 = vrot.slane %v1564, 7
    %v1568 = vsel %vm300, %v1567, %v1563
    %v1569 = vsel %vm302, %v1568, 0
    %1571 = vmatpush.msra.mxu0 0.0
    %1572 = vmatpush.msra.mxu0 0.0
    %1573 = vmatpush.msra.mxu0 0.0
    %1574 = vmatpush.msra.mxu0 0.0
    %1575 = vmatpush.msra.mxu0 0.0
    %1576 = vmatpush.msra.mxu0 0.0
    %1577 = vmatpush.msra.mxu0 0.0
    %1578 = vmatpush.msra.mxu0 0.0
    %1579 = vmatpush.msra.mxu0 0.0
    %1580 = vmatpush.msra.mxu0 0.0
    %1581 = vmatpush.msra.mxu0 0.0
    %1582 = vmatpush.msra.mxu0 0.0
    %1583 = vmatpush.msra.mxu0 %v293
    %1584 = vmatpush.msra.mxu0 %v292
    %1585 = vmatpush.msra.mxu0 %v291
    %1586 = vmatpush.msra.mxu0 %v290
    %1587 = vmatmul.f32.gmra.mxu0 %v1569
    %v1588 = vpop.f32.mrf.mxu0
    %v1589 = vadd.f32 0.0, %v1588
    %1590 = vdwg.mxu0
    %v1592 = vrot.slane %v1589, 1
    %1593 = vrot.lane.b32.xlu0 %v1589, 64
    %v1594 = vpop.permute.xlu0 %1593
    %1595 = vrot.lane.b32.xlu0 %v1592, 64
    %v1596 = vpop.permute.xlu0 %1595
    %v1599 = vadd.f32 %v179, %v1594
    %v1600 = vadd.f32 %v182, %v1596
    %v1601 = vtanh.pop %v1599
    %v1602 = vtanh.pop %v1600
    %1603 = vrot.lane.b32.xlu0 %v1491, 32
    %v1604 = vpop.permute.xlu0 %1603
    %1605 = vrot.lane.b32.xlu0 %v1492, 32
    %v1606 = vpop.permute.xlu0 %1605
    %v1609 = vmul.f32 %v1547, %v1604
    %v1610 = vmul.f32 %v1562, %v1606
    %v1611 = vsub.f32 1.0, %v1547
    %v1612 = vsub.f32 1.0, %v1562
    %1615 = vrot.lane.b32.xlu0 %v1601, 96
    %v1616 = vpop.permute.xlu0 %1615
    %1617 = vrot.lane.b32.xlu0 %v1602, 96
    %v1618 = vpop.permute.xlu0 %1617
    %v1621 = vmul.f32 %v1611, %v1616
    %v1622 = vmul.f32 %v1612, %v1618
    %v1623 = vadd.f32 %v1609, %v1621
    %v1624 = vadd.f32 %v1610, %v1622
    %1627 = vrot.lane.b32.xlu0 %v1623, 96
    %v1628 = vpop.permute.xlu0 %1627
    %1629 = vrot.lane.b32.xlu0 %v1624, 96
    %v1630 = vpop.permute.xlu0 %1629
    %vm1633 = vcmask 253952
    %1634 = vst.msk [vmem:[#allocation13] sm:$0x1] %vm1633, %v1628
    %1635 = vst.msk [vmem:[#allocation13 + $0x8] sm:$0x1] %vm1633, %v1630
    // Predicated region
    $region54: #{tpu_custom_call.1} parent=1 // pred_check
      _
    $region55: #{tpu_custom_call.1} parent=1 // pred_check_branch
      %1637 = sbr.rel (0) target = $region57
    $region56: #{tpu_custom_call.1} parent=1 // pred_region
      %1639 = vsyncadd [#allocation4], 0
      %s1640 = sshll.u32 [#allocation13], 4
      %s1641 = int_to_ptr.vmem [resolvable:$true] %s1640
      %s1642 = sshll.u32 %s7, 4
      %s1643 = int_to_ptr.hbm [resolvable:$true] %s1642
      %1648 = dma.vmem_to_hbm [thread:$0]  %s1641, 256, %s1643, [#allocation4], 128, 128, 8
    $region57: #{tpu_custom_call.1} parent=1 // pred_fallthru
      _
    // Predicated region
    $region58: #{tpu_custom_call.1} parent=1 // pred_check
      _
    $region59: #{tpu_custom_call.1} parent=1 // pred_check_branch
      %1650 = sbr.rel (0) target = $region61
    $region60: #{tpu_custom_call.1} parent=1 // pred_region
      %1652 = dma.done [#allocation4], 256
    $region61: #{tpu_custom_call.1} parent=1 // pred_fallthru
      _
    %1653 = vsyncpa [#allocation3], 1
    %1654 = vsyncpa [#allocation6], 1
    %1655 = vsyncpa [#allocation9], 1
    %1656 = vsyncpa [#allocation12], 1
    %1657 = vsyncpa [#allocation4], 1

</llo_original>
